<compile_context>
chip_gen: v6e
topology: v6e:2x2x1
jax: 0.10.0
libtpu: 0.0.40
codegen_flags: <defaults>
</compile_context>

<pallas_src>
import jax
import jax.numpy as jnp
from jax import lax
from jax.experimental import pallas as pl
from jax.experimental.pallas import tpu as pltpu

# ---- module hyper-parameters (from the PyTorch script) ----------------------
HIDDEN_CHANNELS = 64
INPUT_CHANNELS = 3
KERNEL_SIZE = 3
NUM_CLASSES = 3


# ---- Pallas kernel -----------------------------------------------------------
def convlstm_kernel(x_ref, wih_ref, whh_ref, b_ref, wc_ref, bc_ref,
                    o_ref,
                    xp_ref, h_all_ref, *, unroll):
    """Single invocation; everything resident in VMEM.

    x_ref    : (T*Bp, D)       time-major, batch-padded, flattened frames
    wih_ref  : (D, 4*HID)      fused input weights (gate order i,f,g,o; the g
                               columns are pre-scaled by 2 in the wrapper)
    whh_ref  : (HID, 4*HID)    fused hidden weights (same column layout)
    b_ref    : (1, 4*HID)      fused b_ih + b_hh (g section pre-scaled by 2)
    wc_ref   : (HID, NCp)      conv center-tap weights (transposed, lane-padded)
    bc_ref   : (1, NCp)        conv bias (lane-padded)
    o_ref    : (T, Bp, NCp)    output
    xp_ref   : (T, Bp, 4*HID)  VMEM scratch: hoisted fused input projection
    h_all_ref: (T, Bp, HID)    VMEM scratch: h_t history for the conv head
    """
    T, Bp, HID = h_all_ref.shape

    # ---- hoisted fused input projection (off the serial critical path) ------
    x2d = x_ref[...]                                                # (T*Bp, D)
    xp = (jnp.dot(x2d, wih_ref[...], preferred_element_type=jnp.float32)
          + b_ref[...])                                             # (T*Bp, 4H)
    xp_ref[...] = xp.reshape(xp_ref.shape)

    # W_hh kept resident in vregs across the time loop (64x256 f32 = 16 vregs)
    whh = whh_ref[...]

    # ---- sequential recurrence: one fused 256-wide MXU dot per step ---------
    def step(t, carry):
        h, c = carry
        pre = xp_ref[t] + jnp.dot(h, whh,
                                  preferred_element_type=jnp.float32)  # (Bp,4H)
        # one full-width sigmoid; g gate recovered via tanh(x) = 2*sigmoid(2x)-1
        # (the factor 2 on the g pre-activation is folded into the weights).
        s = jax.nn.sigmoid(pre)
        i_t = s[:, 0 * HID:1 * HID]
        f_t = s[:, 1 * HID:2 * HID]
        g_t = 2.0 * s[:, 2 * HID:3 * HID] - 1.0
        o_t = s[:, 3 * HID:4 * HID]
        c_new = f_t * c + i_t * g_t
        h_new = o_t * jnp.tanh(c_new)
        h_all_ref[t] = h_new
        return (h_new, c_new)

    zeros = jnp.zeros((Bp, HID), jnp.float32)
    lax.fori_loop(0, T, step, (zeros, zeros), unroll=unroll)

    # ---- conv head (center tap) once over all steps: lane-dense single store
    h_all = h_all_ref[...].reshape(T * Bp, HID)
    out = (jnp.dot(h_all, wc_ref[...], preferred_element_type=jnp.float32)
           + bc_ref[...])
    o_ref[...] = out.reshape(o_ref.shape).astype(o_ref.dtype)


# ---- wrapper -----------------------------------------------------------------
def conv_lstm_forward(x, params):
    """x: (B, T, C, H, W) float32 with C*H*W == INPUT_CHANNELS.
    Returns (B, T, NUM_CLASSES, 1, 1), matching the PyTorch module."""
    B, T, C, Hh, Ww = x.shape
    D = C * Hh * Ww
    HID = params["w_hh"].shape[1]           # hidden_channels
    NC = params["w_conv"].shape[0]          # num_classes
    kctr = params["w_conv"].shape[2] // 2   # center tap index

    Bp = ((B + 7) // 8) * 8                 # pad batch to a sublane multiple
    NCp = ((NC + 127) // 128) * 128         # pad out-channels to full lane width

    # time-major, batch-padded, flattened frames -> one resident VMEM block
    x_seq = jnp.transpose(x.reshape(B, T, D).astype(jnp.float32), (1, 0, 2))  # (T,B,D)
    x_seq = jnp.pad(x_seq, ((0, 0), (0, Bp - B), (0, 0)))                     # (T,Bp,D)
    x2d = x_seq.reshape(T * Bp, D)

    # fused, pre-transposed LSTM weights (PyTorch gate order i,f,g,o along
    # output columns).  The *2 of tanh(x) = 2*sigmoid(2x) - 1 is folded into
    # the g-gate columns of W_ih, W_hh and the bias.
    gscale = jnp.concatenate([
        jnp.ones((2 * HID,), jnp.float32),      # i, f
        2.0 * jnp.ones((HID,), jnp.float32),    # g
        jnp.ones((HID,), jnp.float32),          # o
    ])                                                                         # (4H,)
    wih_f = params["w_ih"].T * gscale[None, :]                                 # (D, 4H)
    whh_f = params["w_hh"].T * gscale[None, :]                                 # (HID, 4H)
    b_f = ((params["b_ih"] + params["b_hh"]) * gscale).reshape(1, 4 * HID)     # (1, 4H)

    # conv center tap, zero-padded on out-channels for an unmasked output store
    wc = params["w_conv"][:, :, kctr, kctr].T                                  # (HID,NC)
    wc_p = jnp.pad(wc, ((0, 0), (0, NCp - NC)))                                # (HID,NCp)
    bc_p = jnp.pad(params["b_conv"], (0, NCp - NC)).reshape(1, NCp)            # (1,NCp)

    # bounded unroll once sequences get long (vreg-pressure control)
    unroll = True if T <= 16 else 8

    import functools
    kernel = functools.partial(convlstm_kernel, unroll=unroll)

    out = pl.pallas_call(
        kernel,
        out_shape=jax.ShapeDtypeStruct((T, Bp, NCp), jnp.float32),
        in_specs=[pl.BlockSpec(memory_space=pltpu.MemorySpace.VMEM)] * 6,
        out_specs=pl.BlockSpec(memory_space=pltpu.MemorySpace.VMEM),
        scratch_shapes=[
            pltpu.VMEM((T, Bp, 4 * HID), jnp.float32),   # fused input projection
            pltpu.VMEM((T, Bp, HID), jnp.float32),       # h_t history
        ],
    )(x2d, wih_f, whh_f, b_f, wc_p, bc_p)

    # (T, Bp, NCp) -> (B, T, NC, 1, 1)   (PyTorch: stack(outputs, dim=1))
    return jnp.transpose(out[:, :B, :NC], (1, 0, 2)).reshape(B, T, NC, 1, 1)


# ---- pure-JAX reference (for correctness check) ------------------------------
def conv_lstm_reference(x, params):
    B, T, C, Hh, Ww = x.shape
    D = C * Hh * Ww
    HID = params["w_hh"].shape[1]
    NC = params["w_conv"].shape[0]
    kctr = params["w_conv"].shape[2] // 2

    h = jnp.zeros((B, HID), x.dtype)
    c = jnp.zeros((B, HID), x.dtype)
    outs = []
    for t in range(T):
        xt = x[:, t].reshape(B, D)
        gates = (xt @ params["w_ih"].T + params["b_ih"]
                 + h @ params["w_hh"].T + params["b_hh"])
        i_g = jax.nn.sigmoid(gates[:, 0 * HID:1 * HID])
        f_g = jax.nn.sigmoid(gates[:, 1 * HID:2 * HID])
        g_g = jnp.tanh(gates[:, 2 * HID:3 * HID])
        o_g = jax.nn.sigmoid(gates[:, 3 * HID:4 * HID])
        c = f_g * c + i_g * g_g
        h = o_g * jnp.tanh(c)
        out = h @ params["w_conv"][:, :, kctr, kctr].T + params["b_conv"]
        outs.append(out.reshape(B, NC, 1, 1))
    return jnp.stack(outs, axis=1)


# ---- deterministic parameter init (shapes from the module __init__) ----------
def init_params(key):
    k = jax.random.split(key, 6)
    H4 = 4 * HIDDEN_CHANNELS
    s_lstm = 1.0 / jnp.sqrt(HIDDEN_CHANNELS)
    s_conv = 1.0 / jnp.sqrt(HIDDEN_CHANNELS * KERNEL_SIZE * KERNEL_SIZE)
    return {
        "w_ih": jax.random.uniform(k[0], (H4, INPUT_CHANNELS), jnp.float32,
                                   -s_lstm, s_lstm),
        "w_hh": jax.random.uniform(k[1], (H4, HIDDEN_CHANNELS), jnp.float32,
                                   -s_lstm, s_lstm),
        "b_ih": jax.random.uniform(k[2], (H4,), jnp.float32, -s_lstm, s_lstm),
        "b_hh": jax.random.uniform(k[3], (H4,), jnp.float32, -s_lstm, s_lstm),
        "w_conv": jax.random.uniform(
            k[4], (NUM_CLASSES, HIDDEN_CHANNELS, KERNEL_SIZE, KERNEL_SIZE),
            jnp.float32, -s_conv, s_conv),
        "b_conv": jax.random.uniform(k[5], (NUM_CLASSES,), jnp.float32,
                                     -s_conv, s_conv),
    }


if __name__ == "__main__":
    key = jax.random.PRNGKey(0)
    pkey, xkey = jax.random.split(key)
    params = init_params(pkey)

    # LSTMCell(input_channels=3) forces C*H*W == 3  ->  C=3, H=W=1.
    B, T, C, Hh, Ww = 2, 8, INPUT_CHANNELS, 1, 1
    x = jax.random.normal(xkey, (B, T, C, Hh, Ww), jnp.float32)

    out = jax.block_until_ready(conv_lstm_forward(x, params))
    ref = jax.block_until_ready(conv_lstm_reference(x, params))

    assert out.shape == (B, T, NUM_CLASSES, 1, 1), out.shape
    # slightly relaxed rtol: the g gate uses tanh(x) = 2*sigmoid(2x) - 1
    assert jnp.allclose(out, ref, rtol=1e-4, atol=1e-5), "mismatch vs reference"
    print("KERNEL_OK")
</pallas_src>

<mosaic_0001>
module attributes {stable_mosaic.version = 11 : i64} {
  func.func @convlstm_kernel(%arg0: memref<64x3xf32, #tpu.memory_space<vmem>>, %arg1: memref<3x256xf32, #tpu.memory_space<vmem>>, %arg2: memref<64x256xf32, #tpu.memory_space<vmem>>, %arg3: memref<1x256xf32, #tpu.memory_space<vmem>>, %arg4: memref<64x128xf32, #tpu.memory_space<vmem>>, %arg5: memref<1x128xf32, #tpu.memory_space<vmem>>, %arg6: memref<8x8x128xf32, #tpu.memory_space<vmem>>, %arg7: memref<8x8x256xf32, #tpu.memory_space<vmem>>, %arg8: memref<8x8x64xf32, #tpu.memory_space<vmem>>) attributes {dimension_semantics = [], scalar_prefetch = 0 : i64, scratch_operands = 2 : i64, tpu.core_type = #tpu.core_type<tc>} {
    %c0 = arith.constant 0 : index
    %c0_0 = arith.constant 0 : index
    %0 = vector.load %arg0[%c0, %c0_0] : memref<64x3xf32, #tpu.memory_space<vmem>>, vector<64x3xf32>
    %c0_1 = arith.constant 0 : index
    %c0_2 = arith.constant 0 : index
    %1 = vector.load %arg1[%c0_1, %c0_2] : memref<3x256xf32, #tpu.memory_space<vmem>>, vector<3x256xf32>
    %cst = arith.constant dense<0.000000e+00> : vector<64x256xf32>
    %2 = tpu.matmul %0, %1, %cst {dimension_numbers = #tpu.dot_dimension_numbers<[1], [0], [0], [1], [0, 0, 1, 1], [], []>} : vector<64x3xf32>, vector<3x256xf32>, vector<64x256xf32> -> vector<64x256xf32>
    %c0_3 = arith.constant 0 : index
    %c0_4 = arith.constant 0 : index
    %3 = vector.load %arg3[%c0_3, %c0_4] : memref<1x256xf32, #tpu.memory_space<vmem>>, vector<1x256xf32>
    %4 = vector.broadcast %3 : vector<1x256xf32> to vector<64x256xf32>
    %5 = arith.addf %2, %4 : vector<64x256xf32>
    %6 = vector.shape_cast %5 : vector<64x256xf32> to vector<8x8x256xf32>
    %c0_5 = arith.constant 0 : index
    %c0_6 = arith.constant 0 : index
    %c0_7 = arith.constant 0 : index
    %7 = vector.load %arg7[%c0_5, %c0_6, %c0_7] : memref<8x8x256xf32, #tpu.memory_space<vmem>>, vector<8x8x256xf32>
    tpu.vector_store %arg7[%c0_5, %c0_6, %c0_7], %6 {strides = array<i32>} : memref<8x8x256xf32, #tpu.memory_space<vmem>>, vector<8x8x256xf32>,
    %c0_8 = arith.constant 0 : index
    %c0_9 = arith.constant 0 : index
    %8 = vector.load %arg2[%c0_8, %c0_9] : memref<64x256xf32, #tpu.memory_space<vmem>>, vector<64x256xf32>
    %cst_10 = arith.constant 0.000000e+00 : f32
    %9 = vector.broadcast %cst_10 : f32 to vector<8x64xf32>
    %c0_i32 = arith.constant 0 : i32
    %10 = arith.index_cast %c0_i32 : i32 to index
    %c0_11 = arith.constant 0 : index
    %c0_12 = arith.constant 0 : index
    %11 = vector.load %arg7[%10, %c0_11, %c0_12] : memref<8x8x256xf32, #tpu.memory_space<vmem>>, vector<1x8x256xf32>
    %12 = vector.shape_cast %11 : vector<1x8x256xf32> to vector<8x256xf32>
    %cst_13 = arith.constant dense<0.000000e+00> : vector<8x256xf32>
    %13 = tpu.matmul %9, %8, %cst_13 {dimension_numbers = #tpu.dot_dimension_numbers<[1], [0], [0], [1], [0, 0, 1, 1], [], []>} : vector<8x64xf32>, vector<64x256xf32>, vector<8x256xf32> -> vector<8x256xf32>
    %14 = arith.addf %12, %13 : vector<8x256xf32>
    %15 = arith.negf %14 : vector<8x256xf32>
    %16 = math.exp %15 : vector<8x256xf32>
    %cst_14 = arith.constant 1.000000e+00 : f32
    %17 = vector.broadcast %cst_14 : f32 to vector<8x256xf32>
    %18 = arith.addf %17, %16 : vector<8x256xf32>
    %19 = arith.divf %17, %18 : vector<8x256xf32>
    %20 = vector.extract_strided_slice %19 {offsets = [0, 0], sizes = [8, 64], strides = [1, 1]} : vector<8x256xf32> to vector<8x64xf32>
    %21 = vector.extract_strided_slice %19 {offsets = [0, 64], sizes = [8, 64], strides = [1, 1]} : vector<8x256xf32> to vector<8x64xf32>
    %22 = vector.extract_strided_slice %19 {offsets = [0, 128], sizes = [8, 64], strides = [1, 1]} : vector<8x256xf32> to vector<8x64xf32>
    %cst_15 = arith.constant 2.000000e+00 : f32
    %23 = vector.broadcast %cst_15 : f32 to vector<8x64xf32>
    %24 = arith.mulf %23, %22 : vector<8x64xf32>
    %cst_16 = arith.constant 1.000000e+00 : f32
    %25 = vector.broadcast %cst_16 : f32 to vector<8x64xf32>
    %26 = arith.subf %24, %25 : vector<8x64xf32>
    %27 = vector.extract_strided_slice %19 {offsets = [0, 192], sizes = [8, 64], strides = [1, 1]} : vector<8x256xf32> to vector<8x64xf32>
    %28 = arith.mulf %21, %9 : vector<8x64xf32>
    %29 = arith.mulf %20, %26 : vector<8x64xf32>
    %30 = arith.addf %28, %29 : vector<8x64xf32>
    %31 = math.tanh %30 : vector<8x64xf32>
    %32 = arith.mulf %27, %31 : vector<8x64xf32>
    %33 = arith.index_cast %c0_i32 : i32 to index
    %c0_17 = arith.constant 0 : index
    %c0_18 = arith.constant 0 : index
    %34 = vector.load %arg8[%33, %c0_17, %c0_18] : memref<8x8x64xf32, #tpu.memory_space<vmem>>, vector<1x8x64xf32>
    %35 = vector.shape_cast %34 : vector<1x8x64xf32> to vector<8x64xf32>
    %36 = vector.shape_cast %32 : vector<8x64xf32> to vector<1x8x64xf32>
    tpu.vector_store %arg8[%33, %c0_17, %c0_18], %36 {strides = array<i32>} : memref<8x8x64xf32, #tpu.memory_space<vmem>>, vector<1x8x64xf32>,
    %c1_i32 = arith.constant 1 : i32
    %37 = arith.index_cast %c1_i32 : i32 to index
    %c0_19 = arith.constant 0 : index
    %c0_20 = arith.constant 0 : index
    %38 = vector.load %arg7[%37, %c0_19, %c0_20] : memref<8x8x256xf32, #tpu.memory_space<vmem>>, vector<1x8x256xf32>
    %39 = vector.shape_cast %38 : vector<1x8x256xf32> to vector<8x256xf32>
    %cst_21 = arith.constant dense<0.000000e+00> : vector<8x256xf32>
    %40 = tpu.matmul %32, %8, %cst_21 {dimension_numbers = #tpu.dot_dimension_numbers<[1], [0], [0], [1], [0, 0, 1, 1], [], []>} : vector<8x64xf32>, vector<64x256xf32>, vector<8x256xf32> -> vector<8x256xf32>
    %41 = arith.addf %39, %40 : vector<8x256xf32>
    %42 = arith.negf %41 : vector<8x256xf32>
    %43 = math.exp %42 : vector<8x256xf32>
    %cst_22 = arith.constant 1.000000e+00 : f32
    %44 = vector.broadcast %cst_22 : f32 to vector<8x256xf32>
    %45 = arith.addf %44, %43 : vector<8x256xf32>
    %46 = arith.divf %44, %45 : vector<8x256xf32>
    %47 = vector.extract_strided_slice %46 {offsets = [0, 0], sizes = [8, 64], strides = [1, 1]} : vector<8x256xf32> to vector<8x64xf32>
    %48 = vector.extract_strided_slice %46 {offsets = [0, 64], sizes = [8, 64], strides = [1, 1]} : vector<8x256xf32> to vector<8x64xf32>
    %49 = vector.extract_strided_slice %46 {offsets = [0, 128], sizes = [8, 64], strides = [1, 1]} : vector<8x256xf32> to vector<8x64xf32>
    %cst_23 = arith.constant 2.000000e+00 : f32
    %50 = vector.broadcast %cst_23 : f32 to vector<8x64xf32>
    %51 = arith.mulf %50, %49 : vector<8x64xf32>
    %cst_24 = arith.constant 1.000000e+00 : f32
    %52 = vector.broadcast %cst_24 : f32 to vector<8x64xf32>
    %53 = arith.subf %51, %52 : vector<8x64xf32>
    %54 = vector.extract_strided_slice %46 {offsets = [0, 192], sizes = [8, 64], strides = [1, 1]} : vector<8x256xf32> to vector<8x64xf32>
    %55 = arith.mulf %48, %30 : vector<8x64xf32>
    %56 = arith.mulf %47, %53 : vector<8x64xf32>
    %57 = arith.addf %55, %56 : vector<8x64xf32>
    %58 = math.tanh %57 : vector<8x64xf32>
    %59 = arith.mulf %54, %58 : vector<8x64xf32>
    %60 = arith.index_cast %c1_i32 : i32 to index
    %c0_25 = arith.constant 0 : index
    %c0_26 = arith.constant 0 : index
    %61 = vector.load %arg8[%60, %c0_25, %c0_26] : memref<8x8x64xf32, #tpu.memory_space<vmem>>, vector<1x8x64xf32>
    %62 = vector.shape_cast %61 : vector<1x8x64xf32> to vector<8x64xf32>
    %63 = vector.shape_cast %59 : vector<8x64xf32> to vector<1x8x64xf32>
    tpu.vector_store %arg8[%60, %c0_25, %c0_26], %63 {strides = array<i32>} : memref<8x8x64xf32, #tpu.memory_space<vmem>>, vector<1x8x64xf32>,
    %c2_i32 = arith.constant 2 : i32
    %64 = arith.index_cast %c2_i32 : i32 to index
    %c0_27 = arith.constant 0 : index
    %c0_28 = arith.constant 0 : index
    %65 = vector.load %arg7[%64, %c0_27, %c0_28] : memref<8x8x256xf32, #tpu.memory_space<vmem>>, vector<1x8x256xf32>
    %66 = vector.shape_cast %65 : vector<1x8x256xf32> to vector<8x256xf32>
    %cst_29 = arith.constant dense<0.000000e+00> : vector<8x256xf32>
    %67 = tpu.matmul %59, %8, %cst_29 {dimension_numbers = #tpu.dot_dimension_numbers<[1], [0], [0], [1], [0, 0, 1, 1], [], []>} : vector<8x64xf32>, vector<64x256xf32>, vector<8x256xf32> -> vector<8x256xf32>
    %68 = arith.addf %66, %67 : vector<8x256xf32>
    %69 = arith.negf %68 : vector<8x256xf32>
    %70 = math.exp %69 : vector<8x256xf32>
    %cst_30 = arith.constant 1.000000e+00 : f32
    %71 = vector.broadcast %cst_30 : f32 to vector<8x256xf32>
    %72 = arith.addf %71, %70 : vector<8x256xf32>
    %73 = arith.divf %71, %72 : vector<8x256xf32>
    %74 = vector.extract_strided_slice %73 {offsets = [0, 0], sizes = [8, 64], strides = [1, 1]} : vector<8x256xf32> to vector<8x64xf32>
    %75 = vector.extract_strided_slice %73 {offsets = [0, 64], sizes = [8, 64], strides = [1, 1]} : vector<8x256xf32> to vector<8x64xf32>
    %76 = vector.extract_strided_slice %73 {offsets = [0, 128], sizes = [8, 64], strides = [1, 1]} : vector<8x256xf32> to vector<8x64xf32>
    %cst_31 = arith.constant 2.000000e+00 : f32
    %77 = vector.broadcast %cst_31 : f32 to vector<8x64xf32>
    %78 = arith.mulf %77, %76 : vector<8x64xf32>
    %cst_32 = arith.constant 1.000000e+00 : f32
    %79 = vector.broadcast %cst_32 : f32 to vector<8x64xf32>
    %80 = arith.subf %78, %79 : vector<8x64xf32>
    %81 = vector.extract_strided_slice %73 {offsets = [0, 192], sizes = [8, 64], strides = [1, 1]} : vector<8x256xf32> to vector<8x64xf32>
    %82 = arith.mulf %75, %57 : vector<8x64xf32>
    %83 = arith.mulf %74, %80 : vector<8x64xf32>
    %84 = arith.addf %82, %83 : vector<8x64xf32>
    %85 = math.tanh %84 : vector<8x64xf32>
    %86 = arith.mulf %81, %85 : vector<8x64xf32>
    %87 = arith.index_cast %c2_i32 : i32 to index
    %c0_33 = arith.constant 0 : index
    %c0_34 = arith.constant 0 : index
    %88 = vector.load %arg8[%87, %c0_33, %c0_34] : memref<8x8x64xf32, #tpu.memory_space<vmem>>, vector<1x8x64xf32>
    %89 = vector.shape_cast %88 : vector<1x8x64xf32> to vector<8x64xf32>
    %90 = vector.shape_cast %86 : vector<8x64xf32> to vector<1x8x64xf32>
    tpu.vector_store %arg8[%87, %c0_33, %c0_34], %90 {strides = array<i32>} : memref<8x8x64xf32, #tpu.memory_space<vmem>>, vector<1x8x64xf32>,
    %c3_i32 = arith.constant 3 : i32
    %91 = arith.index_cast %c3_i32 : i32 to index
    %c0_35 = arith.constant 0 : index
    %c0_36 = arith.constant 0 : index
    %92 = vector.load %arg7[%91, %c0_35, %c0_36] : memref<8x8x256xf32, #tpu.memory_space<vmem>>, vector<1x8x256xf32>
    %93 = vector.shape_cast %92 : vector<1x8x256xf32> to vector<8x256xf32>
    %cst_37 = arith.constant dense<0.000000e+00> : vector<8x256xf32>
    %94 = tpu.matmul %86, %8, %cst_37 {dimension_numbers = #tpu.dot_dimension_numbers<[1], [0], [0], [1], [0, 0, 1, 1], [], []>} : vector<8x64xf32>, vector<64x256xf32>, vector<8x256xf32> -> vector<8x256xf32>
    %95 = arith.addf %93, %94 : vector<8x256xf32>
    %96 = arith.negf %95 : vector<8x256xf32>
    %97 = math.exp %96 : vector<8x256xf32>
    %cst_38 = arith.constant 1.000000e+00 : f32
    %98 = vector.broadcast %cst_38 : f32 to vector<8x256xf32>
    %99 = arith.addf %98, %97 : vector<8x256xf32>
    %100 = arith.divf %98, %99 : vector<8x256xf32>
    %101 = vector.extract_strided_slice %100 {offsets = [0, 0], sizes = [8, 64], strides = [1, 1]} : vector<8x256xf32> to vector<8x64xf32>
    %102 = vector.extract_strided_slice %100 {offsets = [0, 64], sizes = [8, 64], strides = [1, 1]} : vector<8x256xf32> to vector<8x64xf32>
    %103 = vector.extract_strided_slice %100 {offsets = [0, 128], sizes = [8, 64], strides = [1, 1]} : vector<8x256xf32> to vector<8x64xf32>
    %cst_39 = arith.constant 2.000000e+00 : f32
    %104 = vector.broadcast %cst_39 : f32 to vector<8x64xf32>
    %105 = arith.mulf %104, %103 : vector<8x64xf32>
    %cst_40 = arith.constant 1.000000e+00 : f32
    %106 = vector.broadcast %cst_40 : f32 to vector<8x64xf32>
    %107 = arith.subf %105, %106 : vector<8x64xf32>
    %108 = vector.extract_strided_slice %100 {offsets = [0, 192], sizes = [8, 64], strides = [1, 1]} : vector<8x256xf32> to vector<8x64xf32>
    %109 = arith.mulf %102, %84 : vector<8x64xf32>
    %110 = arith.mulf %101, %107 : vector<8x64xf32>
    %111 = arith.addf %109, %110 : vector<8x64xf32>
    %112 = math.tanh %111 : vector<8x64xf32>
    %113 = arith.mulf %108, %112 : vector<8x64xf32>
    %114 = arith.index_cast %c3_i32 : i32 to index
    %c0_41 = arith.constant 0 : index
    %c0_42 = arith.constant 0 : index
    %115 = vector.load %arg8[%114, %c0_41, %c0_42] : memref<8x8x64xf32, #tpu.memory_space<vmem>>, vector<1x8x64xf32>
    %116 = vector.shape_cast %115 : vector<1x8x64xf32> to vector<8x64xf32>
    %117 = vector.shape_cast %113 : vector<8x64xf32> to vector<1x8x64xf32>
    tpu.vector_store %arg8[%114, %c0_41, %c0_42], %117 {strides = array<i32>} : memref<8x8x64xf32, #tpu.memory_space<vmem>>, vector<1x8x64xf32>,
    %c4_i32 = arith.constant 4 : i32
    %118 = arith.index_cast %c4_i32 : i32 to index
    %c0_43 = arith.constant 0 : index
    %c0_44 = arith.constant 0 : index
    %119 = vector.load %arg7[%118, %c0_43, %c0_44] : memref<8x8x256xf32, #tpu.memory_space<vmem>>, vector<1x8x256xf32>
    %120 = vector.shape_cast %119 : vector<1x8x256xf32> to vector<8x256xf32>
    %cst_45 = arith.constant dense<0.000000e+00> : vector<8x256xf32>
    %121 = tpu.matmul %113, %8, %cst_45 {dimension_numbers = #tpu.dot_dimension_numbers<[1], [0], [0], [1], [0, 0, 1, 1], [], []>} : vector<8x64xf32>, vector<64x256xf32>, vector<8x256xf32> -> vector<8x256xf32>
    %122 = arith.addf %120, %121 : vector<8x256xf32>
    %123 = arith.negf %122 : vector<8x256xf32>
    %124 = math.exp %123 : vector<8x256xf32>
    %cst_46 = arith.constant 1.000000e+00 : f32
    %125 = vector.broadcast %cst_46 : f32 to vector<8x256xf32>
    %126 = arith.addf %125, %124 : vector<8x256xf32>
    %127 = arith.divf %125, %126 : vector<8x256xf32>
    %128 = vector.extract_strided_slice %127 {offsets = [0, 0], sizes = [8, 64], strides = [1, 1]} : vector<8x256xf32> to vector<8x64xf32>
    %129 = vector.extract_strided_slice %127 {offsets = [0, 64], sizes = [8, 64], strides = [1, 1]} : vector<8x256xf32> to vector<8x64xf32>
    %130 = vector.extract_strided_slice %127 {offsets = [0, 128], sizes = [8, 64], strides = [1, 1]} : vector<8x256xf32> to vector<8x64xf32>
    %cst_47 = arith.constant 2.000000e+00 : f32
    %131 = vector.broadcast %cst_47 : f32 to vector<8x64xf32>
    %132 = arith.mulf %131, %130 : vector<8x64xf32>
    %cst_48 = arith.constant 1.000000e+00 : f32
    %133 = vector.broadcast %cst_48 : f32 to vector<8x64xf32>
    %134 = arith.subf %132, %133 : vector<8x64xf32>
    %135 = vector.extract_strided_slice %127 {offsets = [0, 192], sizes = [8, 64], strides = [1, 1]} : vector<8x256xf32> to vector<8x64xf32>
    %136 = arith.mulf %129, %111 : vector<8x64xf32>
    %137 = arith.mulf %128, %134 : vector<8x64xf32>
    %138 = arith.addf %136, %137 : vector<8x64xf32>
    %139 = math.tanh %138 : vector<8x64xf32>
    %140 = arith.mulf %135, %139 : vector<8x64xf32>
    %141 = arith.index_cast %c4_i32 : i32 to index
    %c0_49 = arith.constant 0 : index
    %c0_50 = arith.constant 0 : index
    %142 = vector.load %arg8[%141, %c0_49, %c0_50] : memref<8x8x64xf32, #tpu.memory_space<vmem>>, vector<1x8x64xf32>
    %143 = vector.shape_cast %142 : vector<1x8x64xf32> to vector<8x64xf32>
    %144 = vector.shape_cast %140 : vector<8x64xf32> to vector<1x8x64xf32>
    tpu.vector_store %arg8[%141, %c0_49, %c0_50], %144 {strides = array<i32>} : memref<8x8x64xf32, #tpu.memory_space<vmem>>, vector<1x8x64xf32>,
    %c5_i32 = arith.constant 5 : i32
    %145 = arith.index_cast %c5_i32 : i32 to index
    %c0_51 = arith.constant 0 : index
    %c0_52 = arith.constant 0 : index
    %146 = vector.load %arg7[%145, %c0_51, %c0_52] : memref<8x8x256xf32, #tpu.memory_space<vmem>>, vector<1x8x256xf32>
    %147 = vector.shape_cast %146 : vector<1x8x256xf32> to vector<8x256xf32>
    %cst_53 = arith.constant dense<0.000000e+00> : vector<8x256xf32>
    %148 = tpu.matmul %140, %8, %cst_53 {dimension_numbers = #tpu.dot_dimension_numbers<[1], [0], [0], [1], [0, 0, 1, 1], [], []>} : vector<8x64xf32>, vector<64x256xf32>, vector<8x256xf32> -> vector<8x256xf32>
    %149 = arith.addf %147, %148 : vector<8x256xf32>
    %150 = arith.negf %149 : vector<8x256xf32>
    %151 = math.exp %150 : vector<8x256xf32>
    %cst_54 = arith.constant 1.000000e+00 : f32
    %152 = vector.broadcast %cst_54 : f32 to vector<8x256xf32>
    %153 = arith.addf %152, %151 : vector<8x256xf32>
    %154 = arith.divf %152, %153 : vector<8x256xf32>
    %155 = vector.extract_strided_slice %154 {offsets = [0, 0], sizes = [8, 64], strides = [1, 1]} : vector<8x256xf32> to vector<8x64xf32>
    %156 = vector.extract_strided_slice %154 {offsets = [0, 64], sizes = [8, 64], strides = [1, 1]} : vector<8x256xf32> to vector<8x64xf32>
    %157 = vector.extract_strided_slice %154 {offsets = [0, 128], sizes = [8, 64], strides = [1, 1]} : vector<8x256xf32> to vector<8x64xf32>
    %cst_55 = arith.constant 2.000000e+00 : f32
    %158 = vector.broadcast %cst_55 : f32 to vector<8x64xf32>
    %159 = arith.mulf %158, %157 : vector<8x64xf32>
    %cst_56 = arith.constant 1.000000e+00 : f32
    %160 = vector.broadcast %cst_56 : f32 to vector<8x64xf32>
    %161 = arith.subf %159, %160 : vector<8x64xf32>
    %162 = vector.extract_strided_slice %154 {offsets = [0, 192], sizes = [8, 64], strides = [1, 1]} : vector<8x256xf32> to vector<8x64xf32>
    %163 = arith.mulf %156, %138 : vector<8x64xf32>
    %164 = arith.mulf %155, %161 : vector<8x64xf32>
    %165 = arith.addf %163, %164 : vector<8x64xf32>
    %166 = math.tanh %165 : vector<8x64xf32>
    %167 = arith.mulf %162, %166 : vector<8x64xf32>
    %168 = arith.index_cast %c5_i32 : i32 to index
    %c0_57 = arith.constant 0 : index
    %c0_58 = arith.constant 0 : index
    %169 = vector.load %arg8[%168, %c0_57, %c0_58] : memref<8x8x64xf32, #tpu.memory_space<vmem>>, vector<1x8x64xf32>
    %170 = vector.shape_cast %169 : vector<1x8x64xf32> to vector<8x64xf32>
    %171 = vector.shape_cast %167 : vector<8x64xf32> to vector<1x8x64xf32>
    tpu.vector_store %arg8[%168, %c0_57, %c0_58], %171 {strides = array<i32>} : memref<8x8x64xf32, #tpu.memory_space<vmem>>, vector<1x8x64xf32>,
    %c6_i32 = arith.constant 6 : i32
    %172 = arith.index_cast %c6_i32 : i32 to index
    %c0_59 = arith.constant 0 : index
    %c0_60 = arith.constant 0 : index
    %173 = vector.load %arg7[%172, %c0_59, %c0_60] : memref<8x8x256xf32, #tpu.memory_space<vmem>>, vector<1x8x256xf32>
    %174 = vector.shape_cast %173 : vector<1x8x256xf32> to vector<8x256xf32>
    %cst_61 = arith.constant dense<0.000000e+00> : vector<8x256xf32>
    %175 = tpu.matmul %167, %8, %cst_61 {dimension_numbers = #tpu.dot_dimension_numbers<[1], [0], [0], [1], [0, 0, 1, 1], [], []>} : vector<8x64xf32>, vector<64x256xf32>, vector<8x256xf32> -> vector<8x256xf32>
    %176 = arith.addf %174, %175 : vector<8x256xf32>
    %177 = arith.negf %176 : vector<8x256xf32>
    %178 = math.exp %177 : vector<8x256xf32>
    %cst_62 = arith.constant 1.000000e+00 : f32
    %179 = vector.broadcast %cst_62 : f32 to vector<8x256xf32>
    %180 = arith.addf %179, %178 : vector<8x256xf32>
    %181 = arith.divf %179, %180 : vector<8x256xf32>
    %182 = vector.extract_strided_slice %181 {offsets = [0, 0], sizes = [8, 64], strides = [1, 1]} : vector<8x256xf32> to vector<8x64xf32>
    %183 = vector.extract_strided_slice %181 {offsets = [0, 64], sizes = [8, 64], strides = [1, 1]} : vector<8x256xf32> to vector<8x64xf32>
    %184 = vector.extract_strided_slice %181 {offsets = [0, 128], sizes = [8, 64], strides = [1, 1]} : vector<8x256xf32> to vector<8x64xf32>
    %cst_63 = arith.constant 2.000000e+00 : f32
    %185 = vector.broadcast %cst_63 : f32 to vector<8x64xf32>
    %186 = arith.mulf %185, %184 : vector<8x64xf32>
    %cst_64 = arith.constant 1.000000e+00 : f32
    %187 = vector.broadcast %cst_64 : f32 to vector<8x64xf32>
    %188 = arith.subf %186, %187 : vector<8x64xf32>
    %189 = vector.extract_strided_slice %181 {offsets = [0, 192], sizes = [8, 64], strides = [1, 1]} : vector<8x256xf32> to vector<8x64xf32>
    %190 = arith.mulf %183, %165 : vector<8x64xf32>
    %191 = arith.mulf %182, %188 : vector<8x64xf32>
    %192 = arith.addf %190, %191 : vector<8x64xf32>
    %193 = math.tanh %192 : vector<8x64xf32>
    %194 = arith.mulf %189, %193 : vector<8x64xf32>
    %195 = arith.index_cast %c6_i32 : i32 to index
    %c0_65 = arith.constant 0 : index
    %c0_66 = arith.constant 0 : index
    %196 = vector.load %arg8[%195, %c0_65, %c0_66] : memref<8x8x64xf32, #tpu.memory_space<vmem>>, vector<1x8x64xf32>
    %197 = vector.shape_cast %196 : vector<1x8x64xf32> to vector<8x64xf32>
    %198 = vector.shape_cast %194 : vector<8x64xf32> to vector<1x8x64xf32>
    tpu.vector_store %arg8[%195, %c0_65, %c0_66], %198 {strides = array<i32>} : memref<8x8x64xf32, #tpu.memory_space<vmem>>, vector<1x8x64xf32>,
    %c7_i32 = arith.constant 7 : i32
    %199 = arith.index_cast %c7_i32 : i32 to index
    %c0_67 = arith.constant 0 : index
    %c0_68 = arith.constant 0 : index
    %200 = vector.load %arg7[%199, %c0_67, %c0_68] : memref<8x8x256xf32, #tpu.memory_space<vmem>>, vector<1x8x256xf32>
    %201 = vector.shape_cast %200 : vector<1x8x256xf32> to vector<8x256xf32>
    %cst_69 = arith.constant dense<0.000000e+00> : vector<8x256xf32>
    %202 = tpu.matmul %194, %8, %cst_69 {dimension_numbers = #tpu.dot_dimension_numbers<[1], [0], [0], [1], [0, 0, 1, 1], [], []>} : vector<8x64xf32>, vector<64x256xf32>, vector<8x256xf32> -> vector<8x256xf32>
    %203 = arith.addf %201, %202 : vector<8x256xf32>
    %204 = arith.negf %203 : vector<8x256xf32>
    %205 = math.exp %204 : vector<8x256xf32>
    %cst_70 = arith.constant 1.000000e+00 : f32
    %206 = vector.broadcast %cst_70 : f32 to vector<8x256xf32>
    %207 = arith.addf %206, %205 : vector<8x256xf32>
    %208 = arith.divf %206, %207 : vector<8x256xf32>
    %209 = vector.extract_strided_slice %208 {offsets = [0, 0], sizes = [8, 64], strides = [1, 1]} : vector<8x256xf32> to vector<8x64xf32>
    %210 = vector.extract_strided_slice %208 {offsets = [0, 64], sizes = [8, 64], strides = [1, 1]} : vector<8x256xf32> to vector<8x64xf32>
    %211 = vector.extract_strided_slice %208 {offsets = [0, 128], sizes = [8, 64], strides = [1, 1]} : vector<8x256xf32> to vector<8x64xf32>
    %cst_71 = arith.constant 2.000000e+00 : f32
    %212 = vector.broadcast %cst_71 : f32 to vector<8x64xf32>
    %213 = arith.mulf %212, %211 : vector<8x64xf32>
    %cst_72 = arith.constant 1.000000e+00 : f32
    %214 = vector.broadcast %cst_72 : f32 to vector<8x64xf32>
    %215 = arith.subf %213, %214 : vector<8x64xf32>
    %216 = vector.extract_strided_slice %208 {offsets = [0, 192], sizes = [8, 64], strides = [1, 1]} : vector<8x256xf32> to vector<8x64xf32>
    %217 = arith.mulf %210, %192 : vector<8x64xf32>
    %218 = arith.mulf %209, %215 : vector<8x64xf32>
    %219 = arith.addf %217, %218 : vector<8x64xf32>
    %220 = math.tanh %219 : vector<8x64xf32>
    %221 = arith.mulf %216, %220 : vector<8x64xf32>
    %222 = arith.index_cast %c7_i32 : i32 to index
    %c0_73 = arith.constant 0 : index
    %c0_74 = arith.constant 0 : index
    %223 = vector.load %arg8[%222, %c0_73, %c0_74] : memref<8x8x64xf32, #tpu.memory_space<vmem>>, vector<1x8x64xf32>
    %224 = vector.shape_cast %223 : vector<1x8x64xf32> to vector<8x64xf32>
    %225 = vector.shape_cast %221 : vector<8x64xf32> to vector<1x8x64xf32>
    tpu.vector_store %arg8[%222, %c0_73, %c0_74], %225 {strides = array<i32>} : memref<8x8x64xf32, #tpu.memory_space<vmem>>, vector<1x8x64xf32>,
    %c8_i32 = arith.constant 8 : i32
    %c0_75 = arith.constant 0 : index
    %c0_76 = arith.constant 0 : index
    %c0_77 = arith.constant 0 : index
    %226 = vector.load %arg8[%c0_75, %c0_76, %c0_77] : memref<8x8x64xf32, #tpu.memory_space<vmem>>, vector<8x8x64xf32>
    %227 = vector.shape_cast %226 : vector<8x8x64xf32> to vector<64x64xf32>
    %c0_78 = arith.constant 0 : index
    %c0_79 = arith.constant 0 : index
    %228 = vector.load %arg4[%c0_78, %c0_79] : memref<64x128xf32, #tpu.memory_space<vmem>>, vector<64x128xf32>
    %cst_80 = arith.constant dense<0.000000e+00> : vector<64x128xf32>
    %229 = tpu.matmul %227, %228, %cst_80 {dimension_numbers = #tpu.dot_dimension_numbers<[1], [0], [0], [1], [0, 0, 1, 1], [], []>} : vector<64x64xf32>, vector<64x128xf32>, vector<64x128xf32> -> vector<64x128xf32>
    %c0_81 = arith.constant 0 : index
    %c0_82 = arith.constant 0 : index
    %230 = vector.load %arg5[%c0_81, %c0_82] : memref<1x128xf32, #tpu.memory_space<vmem>>, vector<1x128xf32>
    %231 = vector.broadcast %230 : vector<1x128xf32> to vector<64x128xf32>
    %232 = arith.addf %229, %231 : vector<64x128xf32>
    %233 = vector.shape_cast %232 : vector<64x128xf32> to vector<8x8x128xf32>
    %c0_83 = arith.constant 0 : index
    %c0_84 = arith.constant 0 : index
    %c0_85 = arith.constant 0 : index
    %234 = vector.load %arg6[%c0_83, %c0_84, %c0_85] : memref<8x8x128xf32, #tpu.memory_space<vmem>>, vector<8x8x128xf32>
    tpu.vector_store %arg6[%c0_83, %c0_84, %c0_85], %233 {strides = array<i32>} : memref<8x8x128xf32, #tpu.memory_space<vmem>>, vector<8x8x128xf32>,
    return
  }
}

</mosaic_0001>

<llo_original>
// kernel: tpu_custom_call.1
$region0: #{tpu_custom_call.1}
  #allocation0 [shape = 'u32[]', space=smem, size = 0x4, offset = 0x4, fixed_abs, tag = 'smem constant byte address 0x4 - core index']
  #allocation1 [shape = 'u32[144,128]{1,0:T(1,128)}', space=vmem, size = 0x12000, scoped, tag = 'internal scratch']
  #allocation2 [shape = 'f32[8,8,256]{2,1,0:T(8,128)}', space=vmem, size = 0x10000, scoped, tag = 'scratch operand']
  #allocation3 [shape = 'f32[8,8,64]{2,1,0:T(8,128)}', space=vmem, size = 0x8000, scoped, tag = 'scratch operand']
  %s0 = inlined_call_operand.vmem [shape: f32[64,3], index: 0, kind: input, shape index: {}]
  %s1 = inlined_call_operand.vmem [shape: f32[3,256], index: 1, kind: input, shape index: {}]
  %s2 = inlined_call_operand.hbm [shape: f32[64,256], index: 2, kind: input, shape index: {}]
  %s3 = inlined_call_operand.vmem [shape: f32[1,256], index: 3, kind: input, shape index: {}]
  %s4 = inlined_call_operand.vmem [shape: f32[64,128], index: 4, kind: input, shape index: {}]
  %s5 = inlined_call_operand.vmem [shape: f32[1,128], index: 5, kind: input, shape index: {}]
  %s6 = inlined_call_operand.hbm [shape: f32[8,8,128], index: 6, kind: output, shape index: {}]
  %s7 = sld [smem:[#allocation0]]
  $region38: #{tpu_custom_call.1} parent=0
    _
  %s9 = ssub.s32 1, %s7
  %s10 = scalar_select 0, %s9, %s7
  $region1: #{tpu_custom_call.1} parent=0
    #allocation4 [shape = 'u8[65536]{0}', space=vmem, size = 0x10000, scoped, tag = 'input window, operand 2, single buffered']
    #allocation5 [shape = 's32[1]{0}', space=sflag, size = 0x4, scoped, tag = 'scoped memory for tpu_custom_call.1']
    #allocation6 [shape = 's32[1]{0}', space=sflag, size = 0x4, scoped, tag = 'scoped memory for tpu_custom_call.1']
    #allocation7 [shape = 'u8[32768]{0}', space=vmem, size = 0x8000, scoped, tag = 'output window, operand 0, single buffered']
    %11 = vsyncpa [#allocation5], 0
    %12 = vsyncpa [#allocation6], 0
    // Predicated region
    $region2: #{tpu_custom_call.1} parent=1 // pred_check
      _
    $region3: #{tpu_custom_call.1} parent=1 // pred_check_branch
      %14 = sbr.rel (0) target = $region5
    $region4: #{tpu_custom_call.1} parent=1 // pred_region
      _
    $region5: #{tpu_custom_call.1} parent=1 // pred_fallthru
      _
    // Predicated region
    $region6: #{tpu_custom_call.1} parent=1 // pred_check
      _
    $region7: #{tpu_custom_call.1} parent=1 // pred_check_branch
      %16 = sbr.rel (0) target = $region9
    $region8: #{tpu_custom_call.1} parent=1 // pred_region
      _
    $region9: #{tpu_custom_call.1} parent=1 // pred_fallthru
      _
    // Predicated region
    $region10: #{tpu_custom_call.1} parent=1 // pred_check
      _
    $region11: #{tpu_custom_call.1} parent=1 // pred_check_branch
      %18 = sbr.rel (0) target = $region13
    $region12: #{tpu_custom_call.1} parent=1 // pred_region
      %s20 = ssub.s32 2048, 2048
      %21 = vsyncadd [#allocation5], %s20
      %s22 = sshll.u32 [#allocation4], 4
      %s23 = int_to_ptr.vmem [resolvable:$true] %s22
      %28 = dma.hbm_to_vmem [thread:$0]  %s2, 2048, %s23, [#allocation5], 256, 256, 16
    $region13: #{tpu_custom_call.1} parent=1 // pred_fallthru
      _
    // Predicated region
    $region14: #{tpu_custom_call.1} parent=1 // pred_check
      _
    $region15: #{tpu_custom_call.1} parent=1 // pred_check_branch
      %30 = sbr.rel (0) target = $region17
    $region16: #{tpu_custom_call.1} parent=1 // pred_region
      _
    $region17: #{tpu_custom_call.1} parent=1 // pred_fallthru
      _
    // Predicated region
    $region18: #{tpu_custom_call.1} parent=1 // pred_check
      _
    $region19: #{tpu_custom_call.1} parent=1 // pred_check_branch
      %32 = sbr.rel (0) target = $region21
    $region20: #{tpu_custom_call.1} parent=1 // pred_region
      _
    $region21: #{tpu_custom_call.1} parent=1 // pred_fallthru
      _
    // Predicated region
    $region22: #{tpu_custom_call.1} parent=1 // pred_check
      _
    $region23: #{tpu_custom_call.1} parent=1 // pred_check_branch
      %34 = sbr.rel (0) target = $region25
    $region24: #{tpu_custom_call.1} parent=1 // pred_region
      _
    $region25: #{tpu_custom_call.1} parent=1 // pred_fallthru
      _
    // Predicated region
    $region26: #{tpu_custom_call.1} parent=1 // pred_check
      _
    $region27: #{tpu_custom_call.1} parent=1 // pred_check_branch
      %36 = sbr.rel (0) target = $region29
    $region28: #{tpu_custom_call.1} parent=1 // pred_region
      %37 = dma.done [#allocation5], 2048
    $region29: #{tpu_custom_call.1} parent=1 // pred_fallthru
      _
    %v38 = vld [vmem:[%s0] sm:$0xff]
    %v39 = vld [vmem:[%s0 + $0x8] sm:$0xff]
    %v40 = vld [vmem:[%s0 + $0x10] sm:$0xff]
    %v41 = vld [vmem:[%s0 + $0x18] sm:$0xff]
    %v42 = vld [vmem:[%s0 + $0x20] sm:$0xff]
    %v43 = vld [vmem:[%s0 + $0x28] sm:$0xff]
    %v44 = vld [vmem:[%s0 + $0x30] sm:$0xff]
    %v45 = vld [vmem:[%s0 + $0x38] sm:$0xff]
    %v46 = vld [vmem:[%s1] sm:$0x77]
    %v47 = vld [vmem:[%s3] sm:$0x3]
    %v49 = vlaneseq
    %v50 = vshrl.u32 %v49, 7
    %v51 = vsub.s32 0, %v50
    %v52 = vrot.slane %v47, %v51
    %v53 = vlaneseq
    %v54 = vshrl.u32 %v53, 7
    %v55 = vsub.s32 1, %v54
    %v56 = vrot.slane %v47, %v55
    %v60 = vcombine.high %v46, %v46
    %vm61 = vcmask 23552
    %v63 = vsel %vm61, %v38, 0
    %v66 = vsel %vm61, %v39, 0
    %v69 = vsel %vm61, %v40, 0
    %v72 = vsel %vm61, %v41, 0
    %v75 = vsel %vm61, %v42, 0
    %v78 = vsel %vm61, %v43, 0
    %v81 = vsel %vm61, %v44, 0
    %v84 = vsel %vm61, %v45, 0
    %vm86 = vcmask 1042432
    %v87 = vsel %vm86, %v46, 0
    %v89 = vsel %vm86, %v60, 0
    %91 = vmatprep.subr.mxu0 0.0
    %92 = vmatpush1.msra.mxu0 0.0
    %93 = vmatprep.subr.mxu0 0.0
    %94 = vmatpush1.msra.mxu0 0.0
    %95 = vmatprep.subr.mxu0 0.0
    %96 = vmatpush1.msra.mxu0 0.0
    %97 = vmatprep.subr.mxu0 0.0
    %98 = vmatpush1.msra.mxu0 0.0
    %99 = vmatprep.subr.mxu0 0.0
    %100 = vmatpush1.msra.mxu0 0.0
    %101 = vmatprep.subr.mxu0 0.0
    %102 = vmatpush1.msra.mxu0 0.0
    %103 = vmatprep.subr.mxu0 0.0
    %104 = vmatpush1.msra.mxu0 0.0
    %105 = vmatprep.subr.mxu0 0.0
    %106 = vmatpush1.msra.mxu0 0.0
    %107 = vmatprep.subr.mxu0 0.0
    %108 = vmatpush1.msra.mxu0 0.0
    %109 = vmatprep.subr.mxu0 0.0
    %110 = vmatpush1.msra.mxu0 0.0
    %111 = vmatprep.subr.mxu0 0.0
    %112 = vmatpush1.msra.mxu0 0.0
    %113 = vmatprep.subr.mxu0 0.0
    %114 = vmatpush1.msra.mxu0 0.0
    %115 = vmatprep.subr.mxu0 0.0
    %116 = vmatpush1.msra.mxu0 0.0
    %117 = vmatprep.subr.mxu0 0.0
    %118 = vmatpush1.msra.mxu0 0.0
    %119 = vmatprep.subr.mxu0 0.0
    %120 = vmatpush1.msra.mxu0 0.0
    %121 = vmatprep.subr.mxu0 %v89
    %122 = vmatpush1.msra.mxu0 %v87
    %123 = vmatprep.subr.mxu0 0.0
    %124 = vmatpush2.msra.mxu0 0.0
    %125 = vmatprep.subr.mxu0 0.0
    %126 = vmatpush2.msra.mxu0 0.0
    %127 = vmatprep.subr.mxu0 0.0
    %128 = vmatpush2.msra.mxu0 0.0
    %129 = vmatprep.subr.mxu0 0.0
    %130 = vmatpush2.msra.mxu0 0.0
    %131 = vmatprep.subr.mxu0 0.0
    %132 = vmatpush2.msra.mxu0 0.0
    %133 = vmatprep.subr.mxu0 0.0
    %134 = vmatpush2.msra.mxu0 0.0
    %135 = vmatprep.subr.mxu0 0.0
    %136 = vmatpush2.msra.mxu0 0.0
    %137 = vmatprep.subr.mxu0 0.0
    %138 = vmatpush2.msra.mxu0 0.0
    %139 = vmatprep.subr.mxu0 0.0
    %140 = vmatpush2.msra.mxu0 0.0
    %141 = vmatprep.subr.mxu0 0.0
    %142 = vmatpush2.msra.mxu0 0.0
    %143 = vmatprep.subr.mxu0 0.0
    %144 = vmatpush2.msra.mxu0 0.0
    %145 = vmatprep.subr.mxu0 0.0
    %146 = vmatpush2.msra.mxu0 0.0
    %147 = vmatprep.subr.mxu0 0.0
    %148 = vmatpush2.msra.mxu0 0.0
    %149 = vmatprep.subr.mxu0 0.0
    %150 = vmatpush2.msra.mxu0 0.0
    %151 = vmatprep.subr.mxu0 0.0
    %152 = vmatpush2.msra.mxu0 0.0
    %153 = vmatprep.subr.mxu0 0.0
    %154 = vmatpush2.msra.mxu0 0.0
    %155 = vmatprep.mubr.f32.mxu0 0.0
    %156 = vmatmul.mubr.f32.gmra.mxu0 %v63
    %v157 = vpop.f32.mrf.mxu0
    %v158 = vadd.f32 %v52, %v157
    %v159 = vpop.f32.mrf.mxu0
    %v160 = vadd.f32 %v56, %v159
    %161 = vmatprep.mubr.f32.mxu0 0.0
    %162 = vmatmul.mubr.f32.gmra.mxu0 %v66
    %v163 = vpop.f32.mrf.mxu0
    %v164 = vadd.f32 %v52, %v163
    %v165 = vpop.f32.mrf.mxu0
    %v166 = vadd.f32 %v56, %v165
    %167 = vmatprep.mubr.f32.mxu0 0.0
    %168 = vmatmul.mubr.f32.gmra.mxu0 %v69
    %v169 = vpop.f32.mrf.mxu0
    %v170 = vadd.f32 %v52, %v169
    %v171 = vpop.f32.mrf.mxu0
    %v172 = vadd.f32 %v56, %v171
    %173 = vmatprep.mubr.f32.mxu0 0.0
    %174 = vmatmul.mubr.f32.gmra.mxu0 %v72
    %v175 = vpop.f32.mrf.mxu0
    %v176 = vadd.f32 %v52, %v175
    %v177 = vpop.f32.mrf.mxu0
    %v178 = vadd.f32 %v56, %v177
    %179 = vmatprep.mubr.f32.mxu0 0.0
    %180 = vmatmul.mubr.f32.gmra.mxu0 %v75
    %v181 = vpop.f32.mrf.mxu0
    %v182 = vadd.f32 %v52, %v181
    %v183 = vpop.f32.mrf.mxu0
    %v184 = vadd.f32 %v56, %v183
    %185 = vmatprep.mubr.f32.mxu0 0.0
    %186 = vmatmul.mubr.f32.gmra.mxu0 %v78
    %v187 = vpop.f32.mrf.mxu0
    %v188 = vadd.f32 %v52, %v187
    %v189 = vpop.f32.mrf.mxu0
    %v190 = vadd.f32 %v56, %v189
    %191 = vmatprep.mubr.f32.mxu0 0.0
    %192 = vmatmul.mubr.f32.gmra.mxu0 %v81
    %v193 = vpop.f32.mrf.mxu0
    %v194 = vadd.f32 %v52, %v193
    %v195 = vpop.f32.mrf.mxu0
    %v196 = vadd.f32 %v56, %v195
    %197 = vmatprep.mubr.f32.mxu0 0.0
    %198 = vmatmul.mubr.f32.gmra.mxu0 %v84
    %v199 = vpop.f32.mrf.mxu0
    %v200 = vadd.f32 %v52, %v199
    %v201 = vpop.f32.mrf.mxu0
    %v202 = vadd.f32 %v56, %v201
    %203 = vdwg.mxu0
    %204 = vst [vmem:[#allocation2] sm:$0xff] %v158
    %205 = vst [vmem:[#allocation2 + $0x8] sm:$0xff] %v160
    %206 = vst [vmem:[#allocation2 + $0x10] sm:$0xff] %v164
    %207 = vst [vmem:[#allocation2 + $0x18] sm:$0xff] %v166
    %208 = vst [vmem:[#allocation2 + $0x20] sm:$0xff] %v170
    %209 = vst [vmem:[#allocation2 + $0x28] sm:$0xff] %v172
    %210 = vst [vmem:[#allocation2 + $0x30] sm:$0xff] %v176
    %211 = vst [vmem:[#allocation2 + $0x38] sm:$0xff] %v178
    %212 = vst [vmem:[#allocation2 + $0x40] sm:$0xff] %v182
    %213 = vst [vmem:[#allocation2 + $0x48] sm:$0xff] %v184
    %214 = vst [vmem:[#allocation2 + $0x50] sm:$0xff] %v188
    %215 = vst [vmem:[#allocation2 + $0x58] sm:$0xff] %v190
    %216 = vst [vmem:[#allocation2 + $0x60] sm:$0xff] %v194
    %217 = vst [vmem:[#allocation2 + $0x68] sm:$0xff] %v196
    %218 = vst [vmem:[#allocation2 + $0x70] sm:$0xff] %v200
    %219 = vst [vmem:[#allocation2 + $0x78] sm:$0xff] %v202
    %v220 = vld [vmem:[#allocation4] sm:$0xff]
    %v221 = vld [vmem:[#allocation4 + $0x8] sm:$0xff]
    %v222 = vld [vmem:[#allocation4 + $0x10] sm:$0xff]
    %v223 = vld [vmem:[#allocation4 + $0x18] sm:$0xff]
    %v224 = vld [vmem:[#allocation4 + $0x20] sm:$0xff]
    %v225 = vld [vmem:[#allocation4 + $0x28] sm:$0xff]
    %v226 = vld [vmem:[#allocation4 + $0x30] sm:$0xff]
    %v227 = vld [vmem:[#allocation4 + $0x38] sm:$0xff]
    %v228 = vld [vmem:[#allocation4 + $0x40] sm:$0xff]
    %v229 = vld [vmem:[#allocation4 + $0x48] sm:$0xff]
    %v230 = vld [vmem:[#allocation4 + $0x50] sm:$0xff]
    %v231 = vld [vmem:[#allocation4 + $0x58] sm:$0xff]
    %v232 = vld [vmem:[#allocation4 + $0x60] sm:$0xff]
    %v233 = vld [vmem:[#allocation4 + $0x68] sm:$0xff]
    %v234 = vld [vmem:[#allocation4 + $0x70] sm:$0xff]
    %v235 = vld [vmem:[#allocation4 + $0x78] sm:$0xff]
    %v236 = vld [vmem:[#allocation2] sm:$0xff]
    %v237 = vld [vmem:[#allocation2 + $0x8] sm:$0xff]
    %vm238 = vcmask 523264
    %v240 = vsel %vm238, 0.0, 0
    %242 = vmatprep.subr.mxu0 0.0
    %243 = vmatpush1.msra.mxu0 0.0
    %244 = vmatprep.subr.mxu0 0.0
    %245 = vmatpush1.msra.mxu0 0.0
    %246 = vmatprep.subr.mxu0 0.0
    %247 = vmatpush1.msra.mxu0 0.0
    %248 = vmatprep.subr.mxu0 0.0
    %249 = vmatpush1.msra.mxu0 0.0
    %250 = vmatprep.subr.mxu0 0.0
    %251 = vmatpush1.msra.mxu0 0.0
    %252 = vmatprep.subr.mxu0 0.0
    %253 = vmatpush1.msra.mxu0 0.0
    %254 = vmatprep.subr.mxu0 0.0
    %255 = vmatpush1.msra.mxu0 0.0
    %256 = vmatprep.subr.mxu0 0.0
    %257 = vmatpush1.msra.mxu0 0.0
    %258 = vmatprep.subr.mxu0 %v235
    %259 = vmatpush1.msra.mxu0 %v234
    %260 = vmatprep.subr.mxu0 %v233
    %261 = vmatpush1.msra.mxu0 %v232
    %262 = vmatprep.subr.mxu0 %v231
    %263 = vmatpush1.msra.mxu0 %v230
    %264 = vmatprep.subr.mxu0 %v229
    %265 = vmatpush1.msra.mxu0 %v228
    %266 = vmatprep.subr.mxu0 %v227
    %267 = vmatpush1.msra.mxu0 %v226
    %268 = vmatprep.subr.mxu0 %v225
    %269 = vmatpush1.msra.mxu0 %v224
    %270 = vmatprep.subr.mxu0 %v223
    %271 = vmatpush1.msra.mxu0 %v222
    %272 = vmatprep.subr.mxu0 %v221
    %273 = vmatpush1.msra.mxu0 %v220
    %274 = vmatprep.subr.mxu0 0.0
    %275 = vmatpush2.msra.mxu0 0.0
    %276 = vmatprep.subr.mxu0 0.0
    %277 = vmatpush2.msra.mxu0 0.0
    %278 = vmatprep.subr.mxu0 0.0
    %279 = vmatpush2.msra.mxu0 0.0
    %280 = vmatprep.subr.mxu0 0.0
    %281 = vmatpush2.msra.mxu0 0.0
    %282 = vmatprep.subr.mxu0 0.0
    %283 = vmatpush2.msra.mxu0 0.0
    %284 = vmatprep.subr.mxu0 0.0
    %285 = vmatpush2.msra.mxu0 0.0
    %286 = vmatprep.subr.mxu0 0.0
    %287 = vmatpush2.msra.mxu0 0.0
    %288 = vmatprep.subr.mxu0 0.0
    %289 = vmatpush2.msra.mxu0 0.0
    %290 = vmatprep.subr.mxu0 0.0
    %291 = vmatpush2.msra.mxu0 0.0
    %292 = vmatprep.subr.mxu0 0.0
    %293 = vmatpush2.msra.mxu0 0.0
    %294 = vmatprep.subr.mxu0 0.0
    %295 = vmatpush2.msra.mxu0 0.0
    %296 = vmatprep.subr.mxu0 0.0
    %297 = vmatpush2.msra.mxu0 0.0
    %298 = vmatprep.subr.mxu0 0.0
    %299 = vmatpush2.msra.mxu0 0.0
    %300 = vmatprep.subr.mxu0 0.0
    %301 = vmatpush2.msra.mxu0 0.0
    %302 = vmatprep.subr.mxu0 0.0
    %303 = vmatpush2.msra.mxu0 0.0
    %304 = vmatprep.subr.mxu0 0.0
    %305 = vmatpush2.msra.mxu0 0.0
    %306 = vmatprep.mubr.f32.mxu0 0.0
    %307 = vmatmul.mubr.f32.gmra.mxu0 %v240
    %v308 = vpop.f32.mrf.mxu0
    %v309 = vadd.f32 0.0, %v308
    %v310 = vpop.f32.mrf.mxu0
    %v311 = vadd.f32 0.0, %v310
    %312 = vdwg.mxu0
    %v313 = vadd.f32 %v236, %v309
    %v314 = vadd.f32 %v237, %v311
    %v315 = vxor.u32 %v313, 2147483648
    %v316 = vxor.u32 %v314, 2147483648
    %v317 = vmul.f32 %v315, 1.442695
    %v318 = vpow.pop %v317
    %v319 = vmul.f32 %v316, 1.442695
    %v320 = vpow.pop %v319
    %v321 = vadd.f32 %v318, 1.0
    %v322 = vadd.f32 %v320, 1.0
    %v323 = vrcp.pop %v321
    %v324 = vmul.f32 1.0, %v323
    %v325 = vrcp.pop %v322
    %v326 = vmul.f32 1.0, %v325
    %v327 = vmul.f32 %v326, 2.0
    %v328 = vsub.f32 %v327, 1.0
    %v329 = vmul.f32 %v324, 0.0
    %v330 = vmul.f32 %v324, %v328
    %332 = vrot.lane.b32.xlu0 %v330, 64
    %v333 = vpop.permute.xlu0 %332
    %v335 = vadd.f32 %v329, %v333
    %v336 = vtanh.pop %v335
    %v337 = vmul.f32 %v326, %v336
    %339 = vrot.lane.b32.xlu0 %v337, 64
    %v340 = vpop.permute.xlu0 %339
    %342 = vst.msk [vmem:[#allocation3] sm:$0xff] %vm238, %v340
    %s343 = scalar_lea.vmem [#allocation2], 16
    %v344 = vld [vmem:[%s343] sm:$0xff]
    %v345 = vld [vmem:[%s343 + $0x8] sm:$0xff]
    %v346 = vsel %vm238, %v340, 0
    %348 = vmatprep.subr.mxu0 0.0
    %349 = vmatpush1.msra.mxu0 0.0
    %350 = vmatprep.subr.mxu0 0.0
    %351 = vmatpush1.msra.mxu0 0.0
    %352 = vmatprep.subr.mxu0 0.0
    %353 = vmatpush1.msra.mxu0 0.0
    %354 = vmatprep.subr.mxu0 0.0
    %355 = vmatpush1.msra.mxu0 0.0
    %356 = vmatprep.subr.mxu0 0.0
    %357 = vmatpush1.msra.mxu0 0.0
    %358 = vmatprep.subr.mxu0 0.0
    %359 = vmatpush1.msra.mxu0 0.0
    %360 = vmatprep.subr.mxu0 0.0
    %361 = vmatpush1.msra.mxu0 0.0
    %362 = vmatprep.subr.mxu0 0.0
    %363 = vmatpush1.msra.mxu0 0.0
    %364 = vmatprep.subr.mxu0 %v235
    %365 = vmatpush1.msra.mxu0 %v234
    %366 = vmatprep.subr.mxu0 %v233
    %367 = vmatpush1.msra.mxu0 %v232
    %368 = vmatprep.subr.mxu0 %v231
    %369 = vmatpush1.msra.mxu0 %v230
    %370 = vmatprep.subr.mxu0 %v229
    %371 = vmatpush1.msra.mxu0 %v228
    %372 = vmatprep.subr.mxu0 %v227
    %373 = vmatpush1.msra.mxu0 %v226
    %374 = vmatprep.subr.mxu0 %v225
    %375 = vmatpush1.msra.mxu0 %v224
    %376 = vmatprep.subr.mxu0 %v223
    %377 = vmatpush1.msra.mxu0 %v222
    %378 = vmatprep.subr.mxu0 %v221
    %379 = vmatpush1.msra.mxu0 %v220
    %380 = vmatprep.subr.mxu0 0.0
    %381 = vmatpush2.msra.mxu0 0.0
    %382 = vmatprep.subr.mxu0 0.0
    %383 = vmatpush2.msra.mxu0 0.0
    %384 = vmatprep.subr.mxu0 0.0
    %385 = vmatpush2.msra.mxu0 0.0
    %386 = vmatprep.subr.mxu0 0.0
    %387 = vmatpush2.msra.mxu0 0.0
    %388 = vmatprep.subr.mxu0 0.0
    %389 = vmatpush2.msra.mxu0 0.0
    %390 = vmatprep.subr.mxu0 0.0
    %391 = vmatpush2.msra.mxu0 0.0
    %392 = vmatprep.subr.mxu0 0.0
    %393 = vmatpush2.msra.mxu0 0.0
    %394 = vmatprep.subr.mxu0 0.0
    %395 = vmatpush2.msra.mxu0 0.0
    %396 = vmatprep.subr.mxu0 0.0
    %397 = vmatpush2.msra.mxu0 0.0
    %398 = vmatprep.subr.mxu0 0.0
    %399 = vmatpush2.msra.mxu0 0.0
    %400 = vmatprep.subr.mxu0 0.0
    %401 = vmatpush2.msra.mxu0 0.0
    %402 = vmatprep.subr.mxu0 0.0
    %403 = vmatpush2.msra.mxu0 0.0
    %404 = vmatprep.subr.mxu0 0.0
    %405 = vmatpush2.msra.mxu0 0.0
    %406 = vmatprep.subr.mxu0 0.0
    %407 = vmatpush2.msra.mxu0 0.0
    %408 = vmatprep.subr.mxu0 0.0
    %409 = vmatpush2.msra.mxu0 0.0
    %410 = vmatprep.subr.mxu0 0.0
    %411 = vmatpush2.msra.mxu0 0.0
    %412 = vmatprep.mubr.f32.mxu0 0.0
    %413 = vmatmul.mubr.f32.gmra.mxu0 %v346
    %v414 = vpop.f32.mrf.mxu0
    %v415 = vadd.f32 0.0, %v414
    %v416 = vpop.f32.mrf.mxu0
    %v417 = vadd.f32 0.0, %v416
    %418 = vdwg.mxu0
    %v419 = vadd.f32 %v344, %v415
    %v420 = vadd.f32 %v345, %v417
    %v421 = vxor.u32 %v419, 2147483648
    %v422 = vxor.u32 %v420, 2147483648
    %v423 = vmul.f32 %v421, 1.442695
    %v424 = vpow.pop %v423
    %v425 = vmul.f32 %v422, 1.442695
    %v426 = vpow.pop %v425
    %v427 = vadd.f32 %v424, 1.0
    %v428 = vadd.f32 %v426, 1.0
    %v429 = vrcp.pop %v427
    %v430 = vmul.f32 1.0, %v429
    %v431 = vrcp.pop %v428
    %v432 = vmul.f32 1.0, %v431
    %v433 = vmul.f32 %v432, 2.0
    %v434 = vsub.f32 %v433, 1.0
    %v435 = vmul.f32 %v430, %v335
    %v436 = vmul.f32 %v430, %v434
    %438 = vrot.lane.b32.xlu0 %v436, 64
    %v439 = vpop.permute.xlu0 %438
    %v441 = vadd.f32 %v435, %v439
    %v442 = vtanh.pop %v441
    %v443 = vmul.f32 %v432, %v442
    %445 = vrot.lane.b32.xlu0 %v443, 64
    %v446 = vpop.permute.xlu0 %445
    %s448 = scalar_lea.vmem [#allocation3], 8
    %449 = vst.msk [vmem:[%s448] sm:$0xff] %vm238, %v446
    %s450 = scalar_lea.vmem [#allocation2], 32
    %v451 = vld [vmem:[%s450] sm:$0xff]
    %v452 = vld [vmem:[%s450 + $0x8] sm:$0xff]
    %v453 = vsel %vm238, %v446, 0
    %455 = vmatprep.subr.mxu0 0.0
    %456 = vmatpush1.msra.mxu0 0.0
    %457 = vmatprep.subr.mxu0 0.0
    %458 = vmatpush1.msra.mxu0 0.0
    %459 = vmatprep.subr.mxu0 0.0
    %460 = vmatpush1.msra.mxu0 0.0
    %461 = vmatprep.subr.mxu0 0.0
    %462 = vmatpush1.msra.mxu0 0.0
    %463 = vmatprep.subr.mxu0 0.0
    %464 = vmatpush1.msra.mxu0 0.0
    %465 = vmatprep.subr.mxu0 0.0
    %466 = vmatpush1.msra.mxu0 0.0
    %467 = vmatprep.subr.mxu0 0.0
    %468 = vmatpush1.msra.mxu0 0.0
    %469 = vmatprep.subr.mxu0 0.0
    %470 = vmatpush1.msra.mxu0 0.0
    %471 = vmatprep.subr.mxu0 %v235
    %472 = vmatpush1.msra.mxu0 %v234
    %473 = vmatprep.subr.mxu0 %v233
    %474 = vmatpush1.msra.mxu0 %v232
    %475 = vmatprep.subr.mxu0 %v231
    %476 = vmatpush1.msra.mxu0 %v230
    %477 = vmatprep.subr.mxu0 %v229
    %478 = vmatpush1.msra.mxu0 %v228
    %479 = vmatprep.subr.mxu0 %v227
    %480 = vmatpush1.msra.mxu0 %v226
    %481 = vmatprep.subr.mxu0 %v225
    %482 = vmatpush1.msra.mxu0 %v224
    %483 = vmatprep.subr.mxu0 %v223
    %484 = vmatpush1.msra.mxu0 %v222
    %485 = vmatprep.subr.mxu0 %v221
    %486 = vmatpush1.msra.mxu0 %v220
    %487 = vmatprep.subr.mxu0 0.0
    %488 = vmatpush2.msra.mxu0 0.0
    %489 = vmatprep.subr.mxu0 0.0
    %490 = vmatpush2.msra.mxu0 0.0
    %491 = vmatprep.subr.mxu0 0.0
    %492 = vmatpush2.msra.mxu0 0.0
    %493 = vmatprep.subr.mxu0 0.0
    %494 = vmatpush2.msra.mxu0 0.0
    %495 = vmatprep.subr.mxu0 0.0
    %496 = vmatpush2.msra.mxu0 0.0
    %497 = vmatprep.subr.mxu0 0.0
    %498 = vmatpush2.msra.mxu0 0.0
    %499 = vmatprep.subr.mxu0 0.0
    %500 = vmatpush2.msra.mxu0 0.0
    %501 = vmatprep.subr.mxu0 0.0
    %502 = vmatpush2.msra.mxu0 0.0
    %503 = vmatprep.subr.mxu0 0.0
    %504 = vmatpush2.msra.mxu0 0.0
    %505 = vmatprep.subr.mxu0 0.0
    %506 = vmatpush2.msra.mxu0 0.0
    %507 = vmatprep.subr.mxu0 0.0
    %508 = vmatpush2.msra.mxu0 0.0
    %509 = vmatprep.subr.mxu0 0.0
    %510 = vmatpush2.msra.mxu0 0.0
    %511 = vmatprep.subr.mxu0 0.0
    %512 = vmatpush2.msra.mxu0 0.0
    %513 = vmatprep.subr.mxu0 0.0
    %514 = vmatpush2.msra.mxu0 0.0
    %515 = vmatprep.subr.mxu0 0.0
    %516 = vmatpush2.msra.mxu0 0.0
    %517 = vmatprep.subr.mxu0 0.0
    %518 = vmatpush2.msra.mxu0 0.0
    %519 = vmatprep.mubr.f32.mxu0 0.0
    %520 = vmatmul.mubr.f32.gmra.mxu0 %v453
    %v521 = vpop.f32.mrf.mxu0
    %v522 = vadd.f32 0.0, %v521
    %v523 = vpop.f32.mrf.mxu0
    %v524 = vadd.f32 0.0, %v523
    %525 = vdwg.mxu0
    %v526 = vadd.f32 %v451, %v522
    %v527 = vadd.f32 %v452, %v524
    %v528 = vxor.u32 %v526, 2147483648
    %v529 = vxor.u32 %v527, 2147483648
    %v530 = vmul.f32 %v528, 1.442695
    %v531 = vpow.pop %v530
    %v532 = vmul.f32 %v529, 1.442695
    %v533 = vpow.pop %v532
    %v534 = vadd.f32 %v531, 1.0
    %v535 = vadd.f32 %v533, 1.0
    %v536 = vrcp.pop %v534
    %v537 = vmul.f32 1.0, %v536
    %v538 = vrcp.pop %v535
    %v539 = vmul.f32 1.0, %v538
    %v540 = vmul.f32 %v539, 2.0
    %v541 = vsub.f32 %v540, 1.0
    %v542 = vmul.f32 %v537, %v441
    %v543 = vmul.f32 %v537, %v541
    %545 = vrot.lane.b32.xlu0 %v543, 64
    %v546 = vpop.permute.xlu0 %545
    %v548 = vadd.f32 %v542, %v546
    %v549 = vtanh.pop %v548
    %v550 = vmul.f32 %v539, %v549
    %552 = vrot.lane.b32.xlu0 %v550, 64
    %v553 = vpop.permute.xlu0 %552
    %s555 = scalar_lea.vmem [#allocation3], 16
    %556 = vst.msk [vmem:[%s555] sm:$0xff] %vm238, %v553
    %s557 = scalar_lea.vmem [#allocation2], 48
    %v558 = vld [vmem:[%s557] sm:$0xff]
    %v559 = vld [vmem:[%s557 + $0x8] sm:$0xff]
    %v560 = vsel %vm238, %v553, 0
    %562 = vmatprep.subr.mxu0 0.0
    %563 = vmatpush1.msra.mxu0 0.0
    %564 = vmatprep.subr.mxu0 0.0
    %565 = vmatpush1.msra.mxu0 0.0
    %566 = vmatprep.subr.mxu0 0.0
    %567 = vmatpush1.msra.mxu0 0.0
    %568 = vmatprep.subr.mxu0 0.0
    %569 = vmatpush1.msra.mxu0 0.0
    %570 = vmatprep.subr.mxu0 0.0
    %571 = vmatpush1.msra.mxu0 0.0
    %572 = vmatprep.subr.mxu0 0.0
    %573 = vmatpush1.msra.mxu0 0.0
    %574 = vmatprep.subr.mxu0 0.0
    %575 = vmatpush1.msra.mxu0 0.0
    %576 = vmatprep.subr.mxu0 0.0
    %577 = vmatpush1.msra.mxu0 0.0
    %578 = vmatprep.subr.mxu0 %v235
    %579 = vmatpush1.msra.mxu0 %v234
    %580 = vmatprep.subr.mxu0 %v233
    %581 = vmatpush1.msra.mxu0 %v232
    %582 = vmatprep.subr.mxu0 %v231
    %583 = vmatpush1.msra.mxu0 %v230
    %584 = vmatprep.subr.mxu0 %v229
    %585 = vmatpush1.msra.mxu0 %v228
    %586 = vmatprep.subr.mxu0 %v227
    %587 = vmatpush1.msra.mxu0 %v226
    %588 = vmatprep.subr.mxu0 %v225
    %589 = vmatpush1.msra.mxu0 %v224
    %590 = vmatprep.subr.mxu0 %v223
    %591 = vmatpush1.msra.mxu0 %v222
    %592 = vmatprep.subr.mxu0 %v221
    %593 = vmatpush1.msra.mxu0 %v220
    %594 = vmatprep.subr.mxu0 0.0
    %595 = vmatpush2.msra.mxu0 0.0
    %596 = vmatprep.subr.mxu0 0.0
    %597 = vmatpush2.msra.mxu0 0.0
    %598 = vmatprep.subr.mxu0 0.0
    %599 = vmatpush2.msra.mxu0 0.0
    %600 = vmatprep.subr.mxu0 0.0
    %601 = vmatpush2.msra.mxu0 0.0
    %602 = vmatprep.subr.mxu0 0.0
    %603 = vmatpush2.msra.mxu0 0.0
    %604 = vmatprep.subr.mxu0 0.0
    %605 = vmatpush2.msra.mxu0 0.0
    %606 = vmatprep.subr.mxu0 0.0
    %607 = vmatpush2.msra.mxu0 0.0
    %608 = vmatprep.subr.mxu0 0.0
    %609 = vmatpush2.msra.mxu0 0.0
    %610 = vmatprep.subr.mxu0 0.0
    %611 = vmatpush2.msra.mxu0 0.0
    %612 = vmatprep.subr.mxu0 0.0
    %613 = vmatpush2.msra.mxu0 0.0
    %614 = vmatprep.subr.mxu0 0.0
    %615 = vmatpush2.msra.mxu0 0.0
    %616 = vmatprep.subr.mxu0 0.0
    %617 = vmatpush2.msra.mxu0 0.0
    %618 = vmatprep.subr.mxu0 0.0
    %619 = vmatpush2.msra.mxu0 0.0
    %620 = vmatprep.subr.mxu0 0.0
    %621 = vmatpush2.msra.mxu0 0.0
    %622 = vmatprep.subr.mxu0 0.0
    %623 = vmatpush2.msra.mxu0 0.0
    %624 = vmatprep.subr.mxu0 0.0
    %625 = vmatpush2.msra.mxu0 0.0
    %626 = vmatprep.mubr.f32.mxu0 0.0
    %627 = vmatmul.mubr.f32.gmra.mxu0 %v560
    %v628 = vpop.f32.mrf.mxu0
    %v629 = vadd.f32 0.0, %v628
    %v630 = vpop.f32.mrf.mxu0
    %v631 = vadd.f32 0.0, %v630
    %632 = vdwg.mxu0
    %v633 = vadd.f32 %v558, %v629
    %v634 = vadd.f32 %v559, %v631
    %v635 = vxor.u32 %v633, 2147483648
    %v636 = vxor.u32 %v634, 2147483648
    %v637 = vmul.f32 %v635, 1.442695
    %v638 = vpow.pop %v637
    %v639 = vmul.f32 %v636, 1.442695
    %v640 = vpow.pop %v639
    %v641 = vadd.f32 %v638, 1.0
    %v642 = vadd.f32 %v640, 1.0
    %v643 = vrcp.pop %v641
    %v644 = vmul.f32 1.0, %v643
    %v645 = vrcp.pop %v642
    %v646 = vmul.f32 1.0, %v645
    %v647 = vmul.f32 %v646, 2.0
    %v648 = vsub.f32 %v647, 1.0
    %v649 = vmul.f32 %v644, %v548
    %v650 = vmul.f32 %v644, %v648
    %652 = vrot.lane.b32.xlu0 %v650, 64
    %v653 = vpop.permute.xlu0 %652
    %v655 = vadd.f32 %v649, %v653
    %v656 = vtanh.pop %v655
    %v657 = vmul.f32 %v646, %v656
    %659 = vrot.lane.b32.xlu0 %v657, 64
    %v660 = vpop.permute.xlu0 %659
    %s662 = scalar_lea.vmem [#allocation3], 24
    %663 = vst.msk [vmem:[%s662] sm:$0xff] %vm238, %v660
    %s664 = scalar_lea.vmem [#allocation2], 64
    %v665 = vld [vmem:[%s664] sm:$0xff]
    %v666 = vld [vmem:[%s664 + $0x8] sm:$0xff]
    %v667 = vsel %vm238, %v660, 0
    %669 = vmatprep.subr.mxu0 0.0
    %670 = vmatpush1.msra.mxu0 0.0
    %671 = vmatprep.subr.mxu0 0.0
    %672 = vmatpush1.msra.mxu0 0.0
    %673 = vmatprep.subr.mxu0 0.0
    %674 = vmatpush1.msra.mxu0 0.0
    %675 = vmatprep.subr.mxu0 0.0
    %676 = vmatpush1.msra.mxu0 0.0
    %677 = vmatprep.subr.mxu0 0.0
    %678 = vmatpush1.msra.mxu0 0.0
    %679 = vmatprep.subr.mxu0 0.0
    %680 = vmatpush1.msra.mxu0 0.0
    %681 = vmatprep.subr.mxu0 0.0
    %682 = vmatpush1.msra.mxu0 0.0
    %683 = vmatprep.subr.mxu0 0.0
    %684 = vmatpush1.msra.mxu0 0.0
    %685 = vmatprep.subr.mxu0 %v235
    %686 = vmatpush1.msra.mxu0 %v234
    %687 = vmatprep.subr.mxu0 %v233
    %688 = vmatpush1.msra.mxu0 %v232
    %689 = vmatprep.subr.mxu0 %v231
    %690 = vmatpush1.msra.mxu0 %v230
    %691 = vmatprep.subr.mxu0 %v229
    %692 = vmatpush1.msra.mxu0 %v228
    %693 = vmatprep.subr.mxu0 %v227
    %694 = vmatpush1.msra.mxu0 %v226
    %695 = vmatprep.subr.mxu0 %v225
    %696 = vmatpush1.msra.mxu0 %v224
    %697 = vmatprep.subr.mxu0 %v223
    %698 = vmatpush1.msra.mxu0 %v222
    %699 = vmatprep.subr.mxu0 %v221
    %700 = vmatpush1.msra.mxu0 %v220
    %701 = vmatprep.subr.mxu0 0.0
    %702 = vmatpush2.msra.mxu0 0.0
    %703 = vmatprep.subr.mxu0 0.0
    %704 = vmatpush2.msra.mxu0 0.0
    %705 = vmatprep.subr.mxu0 0.0
    %706 = vmatpush2.msra.mxu0 0.0
    %707 = vmatprep.subr.mxu0 0.0
    %708 = vmatpush2.msra.mxu0 0.0
    %709 = vmatprep.subr.mxu0 0.0
    %710 = vmatpush2.msra.mxu0 0.0
    %711 = vmatprep.subr.mxu0 0.0
    %712 = vmatpush2.msra.mxu0 0.0
    %713 = vmatprep.subr.mxu0 0.0
    %714 = vmatpush2.msra.mxu0 0.0
    %715 = vmatprep.subr.mxu0 0.0
    %716 = vmatpush2.msra.mxu0 0.0
    %717 = vmatprep.subr.mxu0 0.0
    %718 = vmatpush2.msra.mxu0 0.0
    %719 = vmatprep.subr.mxu0 0.0
    %720 = vmatpush2.msra.mxu0 0.0
    %721 = vmatprep.subr.mxu0 0.0
    %722 = vmatpush2.msra.mxu0 0.0
    %723 = vmatprep.subr.mxu0 0.0
    %724 = vmatpush2.msra.mxu0 0.0
    %725 = vmatprep.subr.mxu0 0.0
    %726 = vmatpush2.msra.mxu0 0.0
    %727 = vmatprep.subr.mxu0 0.0
    %728 = vmatpush2.msra.mxu0 0.0
    %729 = vmatprep.subr.mxu0 0.0
    %730 = vmatpush2.msra.mxu0 0.0
    %731 = vmatprep.subr.mxu0 0.0
    %732 = vmatpush2.msra.mxu0 0.0
    %733 = vmatprep.mubr.f32.mxu0 0.0
    %734 = vmatmul.mubr.f32.gmra.mxu0 %v667
    %v735 = vpop.f32.mrf.mxu0
    %v736 = vadd.f32 0.0, %v735
    %v737 = vpop.f32.mrf.mxu0
    %v738 = vadd.f32 0.0, %v737
    %739 = vdwg.mxu0
    %v740 = vadd.f32 %v665, %v736
    %v741 = vadd.f32 %v666, %v738
    %v742 = vxor.u32 %v740, 2147483648
    %v743 = vxor.u32 %v741, 2147483648
    %v744 = vmul.f32 %v742, 1.442695
    %v745 = vpow.pop %v744
    %v746 = vmul.f32 %v743, 1.442695
    %v747 = vpow.pop %v746
    %v748 = vadd.f32 %v745, 1.0
    %v749 = vadd.f32 %v747, 1.0
    %v750 = vrcp.pop %v748
    %v751 = vmul.f32 1.0, %v750
    %v752 = vrcp.pop %v749
    %v753 = vmul.f32 1.0, %v752
    %v754 = vmul.f32 %v753, 2.0
    %v755 = vsub.f32 %v754, 1.0
    %v756 = vmul.f32 %v751, %v655
    %v757 = vmul.f32 %v751, %v755
    %759 = vrot.lane.b32.xlu0 %v757, 64
    %v760 = vpop.permute.xlu0 %759
    %v762 = vadd.f32 %v756, %v760
    %v763 = vtanh.pop %v762
    %v764 = vmul.f32 %v753, %v763
    %766 = vrot.lane.b32.xlu0 %v764, 64
    %v767 = vpop.permute.xlu0 %766
    %s769 = scalar_lea.vmem [#allocation3], 32
    %770 = vst.msk [vmem:[%s769] sm:$0xff] %vm238, %v767
    %s771 = scalar_lea.vmem [#allocation2], 80
    %v772 = vld [vmem:[%s771] sm:$0xff]
    %v773 = vld [vmem:[%s771 + $0x8] sm:$0xff]
    %v774 = vsel %vm238, %v767, 0
    %776 = vmatprep.subr.mxu0 0.0
    %777 = vmatpush1.msra.mxu0 0.0
    %778 = vmatprep.subr.mxu0 0.0
    %779 = vmatpush1.msra.mxu0 0.0
    %780 = vmatprep.subr.mxu0 0.0
    %781 = vmatpush1.msra.mxu0 0.0
    %782 = vmatprep.subr.mxu0 0.0
    %783 = vmatpush1.msra.mxu0 0.0
    %784 = vmatprep.subr.mxu0 0.0
    %785 = vmatpush1.msra.mxu0 0.0
    %786 = vmatprep.subr.mxu0 0.0
    %787 = vmatpush1.msra.mxu0 0.0
    %788 = vmatprep.subr.mxu0 0.0
    %789 = vmatpush1.msra.mxu0 0.0
    %790 = vmatprep.subr.mxu0 0.0
    %791 = vmatpush1.msra.mxu0 0.0
    %792 = vmatprep.subr.mxu0 %v235
    %793 = vmatpush1.msra.mxu0 %v234
    %794 = vmatprep.subr.mxu0 %v233
    %795 = vmatpush1.msra.mxu0 %v232
    %796 = vmatprep.subr.mxu0 %v231
    %797 = vmatpush1.msra.mxu0 %v230
    %798 = vmatprep.subr.mxu0 %v229
    %799 = vmatpush1.msra.mxu0 %v228
    %800 = vmatprep.subr.mxu0 %v227
    %801 = vmatpush1.msra.mxu0 %v226
    %802 = vmatprep.subr.mxu0 %v225
    %803 = vmatpush1.msra.mxu0 %v224
    %804 = vmatprep.subr.mxu0 %v223
    %805 = vmatpush1.msra.mxu0 %v222
    %806 = vmatprep.subr.mxu0 %v221
    %807 = vmatpush1.msra.mxu0 %v220
    %808 = vmatprep.subr.mxu0 0.0
    %809 = vmatpush2.msra.mxu0 0.0
    %810 = vmatprep.subr.mxu0 0.0
    %811 = vmatpush2.msra.mxu0 0.0
    %812 = vmatprep.subr.mxu0 0.0
    %813 = vmatpush2.msra.mxu0 0.0
    %814 = vmatprep.subr.mxu0 0.0
    %815 = vmatpush2.msra.mxu0 0.0
    %816 = vmatprep.subr.mxu0 0.0
    %817 = vmatpush2.msra.mxu0 0.0
    %818 = vmatprep.subr.mxu0 0.0
    %819 = vmatpush2.msra.mxu0 0.0
    %820 = vmatprep.subr.mxu0 0.0
    %821 = vmatpush2.msra.mxu0 0.0
    %822 = vmatprep.subr.mxu0 0.0
    %823 = vmatpush2.msra.mxu0 0.0
    %824 = vmatprep.subr.mxu0 0.0
    %825 = vmatpush2.msra.mxu0 0.0
    %826 = vmatprep.subr.mxu0 0.0
    %827 = vmatpush2.msra.mxu0 0.0
    %828 = vmatprep.subr.mxu0 0.0
    %829 = vmatpush2.msra.mxu0 0.0
    %830 = vmatprep.subr.mxu0 0.0
    %831 = vmatpush2.msra.mxu0 0.0
    %832 = vmatprep.subr.mxu0 0.0
    %833 = vmatpush2.msra.mxu0 0.0
    %834 = vmatprep.subr.mxu0 0.0
    %835 = vmatpush2.msra.mxu0 0.0
    %836 = vmatprep.subr.mxu0 0.0
    %837 = vmatpush2.msra.mxu0 0.0
    %838 = vmatprep.subr.mxu0 0.0
    %839 = vmatpush2.msra.mxu0 0.0
    %840 = vmatprep.mubr.f32.mxu0 0.0
    %841 = vmatmul.mubr.f32.gmra.mxu0 %v774
    %v842 = vpop.f32.mrf.mxu0
    %v843 = vadd.f32 0.0, %v842
    %v844 = vpop.f32.mrf.mxu0
    %v845 = vadd.f32 0.0, %v844
    %846 = vdwg.mxu0
    %v847 = vadd.f32 %v772, %v843
    %v848 = vadd.f32 %v773, %v845
    %v849 = vxor.u32 %v847, 2147483648
    %v850 = vxor.u32 %v848, 2147483648
    %v851 = vmul.f32 %v849, 1.442695
    %v852 = vpow.pop %v851
    %v853 = vmul.f32 %v850, 1.442695
    %v854 = vpow.pop %v853
    %v855 = vadd.f32 %v852, 1.0
    %v856 = vadd.f32 %v854, 1.0
    %v857 = vrcp.pop %v855
    %v858 = vmul.f32 1.0, %v857
    %v859 = vrcp.pop %v856
    %v860 = vmul.f32 1.0, %v859
    %v861 = vmul.f32 %v860, 2.0
    %v862 = vsub.f32 %v861, 1.0
    %v863 = vmul.f32 %v858, %v762
    %v864 = vmul.f32 %v858, %v862
    %866 = vrot.lane.b32.xlu0 %v864, 64
    %v867 = vpop.permute.xlu0 %866
    %v869 = vadd.f32 %v863, %v867
    %v870 = vtanh.pop %v869
    %v871 = vmul.f32 %v860, %v870
    %873 = vrot.lane.b32.xlu0 %v871, 64
    %v874 = vpop.permute.xlu0 %873
    %s876 = scalar_lea.vmem [#allocation3], 40
    %877 = vst.msk [vmem:[%s876] sm:$0xff] %vm238, %v874
    %s878 = scalar_lea.vmem [#allocation2], 96
    %v879 = vld [vmem:[%s878] sm:$0xff]
    %v880 = vld [vmem:[%s878 + $0x8] sm:$0xff]
    %v881 = vsel %vm238, %v874, 0
    %883 = vmatprep.subr.mxu0 0.0
    %884 = vmatpush1.msra.mxu0 0.0
    %885 = vmatprep.subr.mxu0 0.0
    %886 = vmatpush1.msra.mxu0 0.0
    %887 = vmatprep.subr.mxu0 0.0
    %888 = vmatpush1.msra.mxu0 0.0
    %889 = vmatprep.subr.mxu0 0.0
    %890 = vmatpush1.msra.mxu0 0.0
    %891 = vmatprep.subr.mxu0 0.0
    %892 = vmatpush1.msra.mxu0 0.0
    %893 = vmatprep.subr.mxu0 0.0
    %894 = vmatpush1.msra.mxu0 0.0
    %895 = vmatprep.subr.mxu0 0.0
    %896 = vmatpush1.msra.mxu0 0.0
    %897 = vmatprep.subr.mxu0 0.0
    %898 = vmatpush1.msra.mxu0 0.0
    %899 = vmatprep.subr.mxu0 %v235
    %900 = vmatpush1.msra.mxu0 %v234
    %901 = vmatprep.subr.mxu0 %v233
    %902 = vmatpush1.msra.mxu0 %v232
    %903 = vmatprep.subr.mxu0 %v231
    %904 = vmatpush1.msra.mxu0 %v230
    %905 = vmatprep.subr.mxu0 %v229
    %906 = vmatpush1.msra.mxu0 %v228
    %907 = vmatprep.subr.mxu0 %v227
    %908 = vmatpush1.msra.mxu0 %v226
    %909 = vmatprep.subr.mxu0 %v225
    %910 = vmatpush1.msra.mxu0 %v224
    %911 = vmatprep.subr.mxu0 %v223
    %912 = vmatpush1.msra.mxu0 %v222
    %913 = vmatprep.subr.mxu0 %v221
    %914 = vmatpush1.msra.mxu0 %v220
    %915 = vmatprep.subr.mxu0 0.0
    %916 = vmatpush2.msra.mxu0 0.0
    %917 = vmatprep.subr.mxu0 0.0
    %918 = vmatpush2.msra.mxu0 0.0
    %919 = vmatprep.subr.mxu0 0.0
    %920 = vmatpush2.msra.mxu0 0.0
    %921 = vmatprep.subr.mxu0 0.0
    %922 = vmatpush2.msra.mxu0 0.0
    %923 = vmatprep.subr.mxu0 0.0
    %924 = vmatpush2.msra.mxu0 0.0
    %925 = vmatprep.subr.mxu0 0.0
    %926 = vmatpush2.msra.mxu0 0.0
    %927 = vmatprep.subr.mxu0 0.0
    %928 = vmatpush2.msra.mxu0 0.0
    %929 = vmatprep.subr.mxu0 0.0
    %930 = vmatpush2.msra.mxu0 0.0
    %931 = vmatprep.subr.mxu0 0.0
    %932 = vmatpush2.msra.mxu0 0.0
    %933 = vmatprep.subr.mxu0 0.0
    %934 = vmatpush2.msra.mxu0 0.0
    %935 = vmatprep.subr.mxu0 0.0
    %936 = vmatpush2.msra.mxu0 0.0
    %937 = vmatprep.subr.mxu0 0.0
    %938 = vmatpush2.msra.mxu0 0.0
    %939 = vmatprep.subr.mxu0 0.0
    %940 = vmatpush2.msra.mxu0 0.0
    %941 = vmatprep.subr.mxu0 0.0
    %942 = vmatpush2.msra.mxu0 0.0
    %943 = vmatprep.subr.mxu0 0.0
    %944 = vmatpush2.msra.mxu0 0.0
    %945 = vmatprep.subr.mxu0 0.0
    %946 = vmatpush2.msra.mxu0 0.0
    %947 = vmatprep.mubr.f32.mxu0 0.0
    %948 = vmatmul.mubr.f32.gmra.mxu0 %v881
    %v949 = vpop.f32.mrf.mxu0
    %v950 = vadd.f32 0.0, %v949
    %v951 = vpop.f32.mrf.mxu0
    %v952 = vadd.f32 0.0, %v951
    %953 = vdwg.mxu0
    %v954 = vadd.f32 %v879, %v950
    %v955 = vadd.f32 %v880, %v952
    %v956 = vxor.u32 %v954, 2147483648
    %v957 = vxor.u32 %v955, 2147483648
    %v958 = vmul.f32 %v956, 1.442695
    %v959 = vpow.pop %v958
    %v960 = vmul.f32 %v957, 1.442695
    %v961 = vpow.pop %v960
    %v962 = vadd.f32 %v959, 1.0
    %v963 = vadd.f32 %v961, 1.0
    %v964 = vrcp.pop %v962
    %v965 = vmul.f32 1.0, %v964
    %v966 = vrcp.pop %v963
    %v967 = vmul.f32 1.0, %v966
    %v968 = vmul.f32 %v967, 2.0
    %v969 = vsub.f32 %v968, 1.0
    %v970 = vmul.f32 %v965, %v869
    %v971 = vmul.f32 %v965, %v969
    %973 = vrot.lane.b32.xlu0 %v971, 64
    %v974 = vpop.permute.xlu0 %973
    %v976 = vadd.f32 %v970, %v974
    %v977 = vtanh.pop %v976
    %v978 = vmul.f32 %v967, %v977
    %980 = vrot.lane.b32.xlu0 %v978, 64
    %v981 = vpop.permute.xlu0 %980
    %s983 = scalar_lea.vmem [#allocation3], 48
    %984 = vst.msk [vmem:[%s983] sm:$0xff] %vm238, %v981
    %s985 = scalar_lea.vmem [#allocation2], 112
    %v986 = vld [vmem:[%s985] sm:$0xff]
    %v987 = vld [vmem:[%s985 + $0x8] sm:$0xff]
    %v988 = vsel %vm238, %v981, 0
    %990 = vmatprep.subr.mxu0 0.0
    %991 = vmatpush1.msra.mxu0 0.0
    %992 = vmatprep.subr.mxu0 0.0
    %993 = vmatpush1.msra.mxu0 0.0
    %994 = vmatprep.subr.mxu0 0.0
    %995 = vmatpush1.msra.mxu0 0.0
    %996 = vmatprep.subr.mxu0 0.0
    %997 = vmatpush1.msra.mxu0 0.0
    %998 = vmatprep.subr.mxu0 0.0
    %999 = vmatpush1.msra.mxu0 0.0
    %1000 = vmatprep.subr.mxu0 0.0
    %1001 = vmatpush1.msra.mxu0 0.0
    %1002 = vmatprep.subr.mxu0 0.0
    %1003 = vmatpush1.msra.mxu0 0.0
    %1004 = vmatprep.subr.mxu0 0.0
    %1005 = vmatpush1.msra.mxu0 0.0
    %1006 = vmatprep.subr.mxu0 %v235
    %1007 = vmatpush1.msra.mxu0 %v234
    %1008 = vmatprep.subr.mxu0 %v233
    %1009 = vmatpush1.msra.mxu0 %v232
    %1010 = vmatprep.subr.mxu0 %v231
    %1011 = vmatpush1.msra.mxu0 %v230
    %1012 = vmatprep.subr.mxu0 %v229
    %1013 = vmatpush1.msra.mxu0 %v228
    %1014 = vmatprep.subr.mxu0 %v227
    %1015 = vmatpush1.msra.mxu0 %v226
    %1016 = vmatprep.subr.mxu0 %v225
    %1017 = vmatpush1.msra.mxu0 %v224
    %1018 = vmatprep.subr.mxu0 %v223
    %1019 = vmatpush1.msra.mxu0 %v222
    %1020 = vmatprep.subr.mxu0 %v221
    %1021 = vmatpush1.msra.mxu0 %v220
    %1022 = vmatprep.subr.mxu0 0.0
    %1023 = vmatpush2.msra.mxu0 0.0
    %1024 = vmatprep.subr.mxu0 0.0
    %1025 = vmatpush2.msra.mxu0 0.0
    %1026 = vmatprep.subr.mxu0 0.0
    %1027 = vmatpush2.msra.mxu0 0.0
    %1028 = vmatprep.subr.mxu0 0.0
    %1029 = vmatpush2.msra.mxu0 0.0
    %1030 = vmatprep.subr.mxu0 0.0
    %1031 = vmatpush2.msra.mxu0 0.0
    %1032 = vmatprep.subr.mxu0 0.0
    %1033 = vmatpush2.msra.mxu0 0.0
    %1034 = vmatprep.subr.mxu0 0.0
    %1035 = vmatpush2.msra.mxu0 0.0
    %1036 = vmatprep.subr.mxu0 0.0
    %1037 = vmatpush2.msra.mxu0 0.0
    %1038 = vmatprep.subr.mxu0 0.0
    %1039 = vmatpush2.msra.mxu0 0.0
    %1040 = vmatprep.subr.mxu0 0.0
    %1041 = vmatpush2.msra.mxu0 0.0
    %1042 = vmatprep.subr.mxu0 0.0
    %1043 = vmatpush2.msra.mxu0 0.0
    %1044 = vmatprep.subr.mxu0 0.0
    %1045 = vmatpush2.msra.mxu0 0.0
    %1046 = vmatprep.subr.mxu0 0.0
    %1047 = vmatpush2.msra.mxu0 0.0
    %1048 = vmatprep.subr.mxu0 0.0
    %1049 = vmatpush2.msra.mxu0 0.0
    %1050 = vmatprep.subr.mxu0 0.0
    %1051 = vmatpush2.msra.mxu0 0.0
    %1052 = vmatprep.subr.mxu0 0.0
    %1053 = vmatpush2.msra.mxu0 0.0
    %1054 = vmatprep.mubr.f32.mxu0 0.0
    %1055 = vmatmul.mubr.f32.gmra.mxu0 %v988
    %v1056 = vpop.f32.mrf.mxu0
    %v1057 = vadd.f32 0.0, %v1056
    %v1058 = vpop.f32.mrf.mxu0
    %v1059 = vadd.f32 0.0, %v1058
    %1060 = vdwg.mxu0
    %v1061 = vadd.f32 %v986, %v1057
    %v1062 = vadd.f32 %v987, %v1059
    %v1063 = vxor.u32 %v1061, 2147483648
    %v1064 = vxor.u32 %v1062, 2147483648
    %v1065 = vmul.f32 %v1063, 1.442695
    %v1066 = vpow.pop %v1065
    %v1067 = vmul.f32 %v1064, 1.442695
    %v1068 = vpow.pop %v1067
    %v1069 = vadd.f32 %v1066, 1.0
    %v1070 = vadd.f32 %v1068, 1.0
    %v1071 = vrcp.pop %v1069
    %v1072 = vmul.f32 1.0, %v1071
    %v1073 = vrcp.pop %v1070
    %v1074 = vmul.f32 1.0, %v1073
    %v1075 = vmul.f32 %v1074, 2.0
    %v1076 = vsub.f32 %v1075, 1.0
    %v1077 = vmul.f32 %v1072, %v976
    %v1078 = vmul.f32 %v1072, %v1076
    %1080 = vrot.lane.b32.xlu0 %v1078, 64
    %v1081 = vpop.permute.xlu0 %1080
    %v1083 = vadd.f32 %v1077, %v1081
    %v1084 = vtanh.pop %v1083
    %v1085 = vmul.f32 %v1074, %v1084
    %1087 = vrot.lane.b32.xlu0 %v1085, 64
    %v1088 = vpop.permute.xlu0 %1087
    %s1090 = scalar_lea.vmem [#allocation3], 56
    %1091 = vst.msk [vmem:[%s1090] sm:$0xff] %vm238, %v1088
    %v1092 = vld [vmem:[#allocation3] sm:$0xff]
    %v1093 = vld [vmem:[#allocation3 + $0x8] sm:$0xff]
    %v1094 = vld [vmem:[#allocation3 + $0x10] sm:$0xff]
    %v1095 = vld [vmem:[#allocation3 + $0x18] sm:$0xff]
    %v1096 = vld [vmem:[#allocation3 + $0x20] sm:$0xff]
    %v1097 = vld [vmem:[#allocation3 + $0x28] sm:$0xff]
    %v1098 = vld [vmem:[#allocation3 + $0x30] sm:$0xff]
    %v1099 = vld [vmem:[#allocation3 + $0x38] sm:$0xff]
    %v1100 = vld [vmem:[%s4] sm:$0xff]
    %v1101 = vld [vmem:[%s4 + $0x8] sm:$0xff]
    %v1102 = vld [vmem:[%s4 + $0x10] sm:$0xff]
    %v1103 = vld [vmem:[%s4 + $0x18] sm:$0xff]
    %v1104 = vld [vmem:[%s4 + $0x20] sm:$0xff]
    %v1105 = vld [vmem:[%s4 + $0x28] sm:$0xff]
    %v1106 = vld [vmem:[%s4 + $0x30] sm:$0xff]
    %v1107 = vld [vmem:[%s4 + $0x38] sm:$0xff]
    %v1108 = vld [vmem:[%s5] sm:$0x1]
    %v1110 = vlaneseq
    %v1111 = vshrl.u32 %v1110, 7
    %v1112 = vsub.s32 0, %v1111
    %v1113 = vrot.slane %v1108, %v1112
    %v1116 = vsel %vm238, %v1092, 0
    %v1119 = vsel %vm238, %v1093, 0
    %v1122 = vsel %vm238, %v1094, 0
    %v1125 = vsel %vm238, %v1095, 0
    %v1128 = vsel %vm238, %v1096, 0
    %v1131 = vsel %vm238, %v1097, 0
    %v1134 = vsel %vm238, %v1098, 0
    %v1137 = vsel %vm238, %v1099, 0
    %1139 = vmatprep.subr.mxu0 0.0
    %1140 = vmatpush1.msra.mxu0 0.0
    %1141 = vmatprep.subr.mxu0 0.0
    %1142 = vmatpush1.msra.mxu0 0.0
    %1143 = vmatprep.subr.mxu0 0.0
    %1144 = vmatpush1.msra.mxu0 0.0
    %1145 = vmatprep.subr.mxu0 0.0
    %1146 = vmatpush1.msra.mxu0 0.0
    %1147 = vmatprep.subr.mxu0 0.0
    %1148 = vmatpush1.msra.mxu0 0.0
    %1149 = vmatprep.subr.mxu0 0.0
    %1150 = vmatpush1.msra.mxu0 0.0
    %1151 = vmatprep.subr.mxu0 0.0
    %1152 = vmatpush1.msra.mxu0 0.0
    %1153 = vmatprep.subr.mxu0 0.0
    %1154 = vmatpush1.msra.mxu0 0.0
    %1155 = vmatprep.subr.mxu0 0.0
    %1156 = vmatpush1.msra.mxu0 %v1107
    %1157 = vmatprep.subr.mxu0 0.0
    %1158 = vmatpush1.msra.mxu0 %v1106
    %1159 = vmatprep.subr.mxu0 0.0
    %1160 = vmatpush1.msra.mxu0 %v1105
    %1161 = vmatprep.subr.mxu0 0.0
    %1162 = vmatpush1.msra.mxu0 %v1104
    %1163 = vmatprep.subr.mxu0 0.0
    %1164 = vmatpush1.msra.mxu0 %v1103
    %1165 = vmatprep.subr.mxu0 0.0
    %1166 = vmatpush1.msra.mxu0 %v1102
    %1167 = vmatprep.subr.mxu0 0.0
    %1168 = vmatpush1.msra.mxu0 %v1101
    %1169 = vmatprep.subr.mxu0 0.0
    %1170 = vmatpush1.msra.mxu0 %v1100
    %1171 = vmatprep.subr.mxu0 0.0
    %1172 = vmatpush2.msra.mxu0 0.0
    %1173 = vmatprep.subr.mxu0 0.0
    %1174 = vmatpush2.msra.mxu0 0.0
    %1175 = vmatprep.subr.mxu0 0.0
    %1176 = vmatpush2.msra.mxu0 0.0
    %1177 = vmatprep.subr.mxu0 0.0
    %1178 = vmatpush2.msra.mxu0 0.0
    %1179 = vmatprep.subr.mxu0 0.0
    %1180 = vmatpush2.msra.mxu0 0.0
    %1181 = vmatprep.subr.mxu0 0.0
    %1182 = vmatpush2.msra.mxu0 0.0
    %1183 = vmatprep.subr.mxu0 0.0
    %1184 = vmatpush2.msra.mxu0 0.0
    %1185 = vmatprep.subr.mxu0 0.0
    %1186 = vmatpush2.msra.mxu0 0.0
    %1187 = vmatprep.subr.mxu0 0.0
    %1188 = vmatpush2.msra.mxu0 0.0
    %1189 = vmatprep.subr.mxu0 0.0
    %1190 = vmatpush2.msra.mxu0 0.0
    %1191 = vmatprep.subr.mxu0 0.0
    %1192 = vmatpush2.msra.mxu0 0.0
    %1193 = vmatprep.subr.mxu0 0.0
    %1194 = vmatpush2.msra.mxu0 0.0
    %1195 = vmatprep.subr.mxu0 0.0
    %1196 = vmatpush2.msra.mxu0 0.0
    %1197 = vmatprep.subr.mxu0 0.0
    %1198 = vmatpush2.msra.mxu0 0.0
    %1199 = vmatprep.subr.mxu0 0.0
    %1200 = vmatpush2.msra.mxu0 0.0
    %1201 = vmatprep.subr.mxu0 0.0
    %1202 = vmatpush2.msra.mxu0 0.0
    %1203 = vmatprep.mubr.f32.mxu0 0.0
    %1204 = vmatmul.mubr.f32.gmra.mxu0 %v1116
    %v1205 = vpop.f32.mrf.mxu0
    %v1206 = vadd.f32 %v1113, %v1205
    %v1207 = vpop.f32.mrf.mxu0
    %1208 = vmatprep.mubr.f32.mxu0 0.0
    %1209 = vmatmul.mubr.f32.gmra.mxu0 %v1119
    %v1210 = vpop.f32.mrf.mxu0
    %v1211 = vadd.f32 %v1113, %v1210
    %v1212 = vpop.f32.mrf.mxu0
    %1213 = vmatprep.mubr.f32.mxu0 0.0
    %1214 = vmatmul.mubr.f32.gmra.mxu0 %v1122
    %v1215 = vpop.f32.mrf.mxu0
    %v1216 = vadd.f32 %v1113, %v1215
    %v1217 = vpop.f32.mrf.mxu0
    %1218 = vmatprep.mubr.f32.mxu0 0.0
    %1219 = vmatmul.mubr.f32.gmra.mxu0 %v1125
    %v1220 = vpop.f32.mrf.mxu0
    %v1221 = vadd.f32 %v1113, %v1220
    %v1222 = vpop.f32.mrf.mxu0
    %1223 = vmatprep.mubr.f32.mxu0 0.0
    %1224 = vmatmul.mubr.f32.gmra.mxu0 %v1128
    %v1225 = vpop.f32.mrf.mxu0
    %v1226 = vadd.f32 %v1113, %v1225
    %v1227 = vpop.f32.mrf.mxu0
    %1228 = vmatprep.mubr.f32.mxu0 0.0
    %1229 = vmatmul.mubr.f32.gmra.mxu0 %v1131
    %v1230 = vpop.f32.mrf.mxu0
    %v1231 = vadd.f32 %v1113, %v1230
    %v1232 = vpop.f32.mrf.mxu0
    %1233 = vmatprep.mubr.f32.mxu0 0.0
    %1234 = vmatmul.mubr.f32.gmra.mxu0 %v1134
    %v1235 = vpop.f32.mrf.mxu0
    %v1236 = vadd.f32 %v1113, %v1235
    %v1237 = vpop.f32.mrf.mxu0
    %1238 = vmatprep.mubr.f32.mxu0 0.0
    %1239 = vmatmul.mubr.f32.gmra.mxu0 %v1137
    %v1240 = vpop.f32.mrf.mxu0
    %v1241 = vadd.f32 %v1113, %v1240
    %v1242 = vpop.f32.mrf.mxu0
    %1243 = vdwg.mxu0
    %1244 = vst [vmem:[#allocation7] sm:$0xff] %v1206
    %1245 = vst [vmem:[#allocation7 + $0x8] sm:$0xff] %v1211
    %1246 = vst [vmem:[#allocation7 + $0x10] sm:$0xff] %v1216
    %1247 = vst [vmem:[#allocation7 + $0x18] sm:$0xff] %v1221
    %1248 = vst [vmem:[#allocation7 + $0x20] sm:$0xff] %v1226
    %1249 = vst [vmem:[#allocation7 + $0x28] sm:$0xff] %v1231
    %1250 = vst [vmem:[#allocation7 + $0x30] sm:$0xff] %v1236
    %1251 = vst [vmem:[#allocation7 + $0x38] sm:$0xff] %v1241
    // Predicated region
    $region30: #{tpu_custom_call.1} parent=1 // pred_check
      _
    $region31: #{tpu_custom_call.1} parent=1 // pred_check_branch
      %1253 = sbr.rel (0) target = $region33
    $region32: #{tpu_custom_call.1} parent=1 // pred_region
      %s1255 = ssub.s32 1024, 1024
      %1256 = vsyncadd [#allocation6], %s1255
      %s1257 = sshll.u32 [#allocation7], 4
      %s1258 = int_to_ptr.vmem [resolvable:$true] %s1257
      %1263 = dma.vmem_to_hbm [thread:$0]  %s1258, 1024, %s6, [#allocation6], 128, 128, 8
    $region33: #{tpu_custom_call.1} parent=1 // pred_fallthru
      _
    // Predicated region
    $region34: #{tpu_custom_call.1} parent=1 // pred_check
      _
    $region35: #{tpu_custom_call.1} parent=1 // pred_check_branch
      %1265 = sbr.rel (0) target = $region37
    $region36: #{tpu_custom_call.1} parent=1 // pred_region
      %1266 = dma.done [#allocation6], 1024
    $region37: #{tpu_custom_call.1} parent=1 // pred_fallthru
      _
    %1267 = vsyncpa [#allocation5], 1
    %1268 = vsyncpa [#allocation6], 1

</llo_original>
